<compile_context>
chip_gen: v7x
topology: tpu7x:2x2x1
jax: 0.10.0
libtpu: 0.0.40
codegen_flags: <defaults>
</compile_context>

<pallas_src>
import functools

import jax
import jax.numpy as jnp
from jax import lax
from jax.experimental import pallas as pl
from jax.experimental.pallas import tpu as pltpu


# Explicit scoped-VMEM cap: covers t_hw up to ~4096 at P=256 (above v5e's 16 MiB
# default scoped limit) while staying inside v7x's 64 MiB physical VMEM per TC.
_VMEM_LIMIT_BYTES = 48 * 1024 * 1024


def _proj_head_kernel(x_ref, w1_ref, b_ref, w2_ref, o_ref):
    """One (image, HW-tile) step: conv1(+folded BN) -> ReLU -> conv2 -> L2-normalize.

    x_ref : (C, t)   one image's channels x a tile of pixels (input dtype)
    w1_ref: (P, C)   conv1 weight, eval-mode BN folded in (bf16)
    b_ref : (P, 2)   f32; col 0 = conv1 bias (BN folded), col 1 = conv2 bias
    w2_ref: (P, P)   conv2 weight (bf16)
    o_ref : (P, t)   L2-normalized output tile
    """
    b1 = b_ref[:, 0:1]                      # (P, 1), broadcasts along lanes
    b2 = b_ref[:, 1:2]

    # Conv1 on the MXU (bf16 operands, f32 accumulation).  A padded K for small C is
    # fine: the MXU is otherwise idle and this keeps the VALU/XLU off the critical
    # path (they are needed for the L2 reduction below).
    x = x_ref[...].astype(jnp.bfloat16)
    h = jnp.dot(w1_ref[...], x, preferred_element_type=jnp.float32) + b1
    h = jnp.maximum(h, 0.0)                 # ReLU (f32, VPU)

    # Conv2 on the MXU: bf16 operands, f32 accumulation.
    y = jnp.dot(w2_ref[...], h.astype(w2_ref.dtype),
                preferred_element_type=jnp.float32) + b2

    # F.normalize(y, p=2, dim=channel) == y / max(||y||, 1e-12)
    #   == y * rsqrt(max(sum(y^2), 1e-24)); rsqrt on the EUP, reduce over sublanes.
    ss = jnp.sum(y * y, axis=0, keepdims=True)     # (1, t)
    inv = lax.rsqrt(jnp.maximum(ss, 1e-24))
    o_ref[...] = (y * inv).astype(o_ref.dtype)


def _choose_t(hw, t_req):
    """HW tile: full HW when it fits in one tile, otherwise a multiple of 128 so
    output stores stay lane-dense / unmasked (the ragged tail of the last tile is
    masked by Pallas and discarded on store)."""
    if t_req >= hw:
        return hw
    return max(128, (t_req // 128) * 128)


@functools.partial(jax.jit, static_argnames=("t_hw", "out_dtype"))
def projection_head_pallas(x_nchw, w1, b1, w2, b2, *, t_hw=2048, out_dtype=None):
    """ProjectionHead forward (eval-mode BN folded into conv1), native NCHW.

    x_nchw: (N, C, H, W).  w1: (P, C) with BN folded, b1: (P,), w2: (P, P), b2: (P,).
    Returns (N, P, H, W), L2-normalized over the channel dim.
    out_dtype: optional narrower output dtype (e.g. jnp.bfloat16) to halve the
    dominant HBM write stream; defaults to the input dtype.
    """
    N, C, H, W = x_nchw.shape
    P = w1.shape[0]
    HW = H * W
    if out_dtype is None:
        out_dtype = x_nchw.dtype

    # NCHW -> (N, C, H*W) and (N, P, H*W) -> (N, P, H, W) are free reshapes of
    # contiguous memory (no transpose, no HBM round trip).  x keeps its dtype; the
    # bf16 cast for the MXU happens in-kernel to avoid an extra HBM pass.
    x = x_nchw.reshape(N, C, HW)
    w1_in = w1.astype(jnp.bfloat16)
    w2_in = w2.astype(jnp.bfloat16)
    b_in = jnp.stack([b1, b2], axis=1).astype(jnp.float32)   # (P, 2): one bias DMA

    t = _choose_t(HW, t_hw)
    grid = (N, pl.cdiv(HW, t))
    # Both grid axes are embarrassingly parallel; on multi-TensorCore parts (v7x)
    # the batch axis gives an even megacore split when N is even.  (If N == 1 and HW
    # fits in a single tile the grid collapses to one step — optimal for one TC.)

    out = pl.pallas_call(
        _proj_head_kernel,
        out_shape=jax.ShapeDtypeStruct((N, P, HW), out_dtype),
        grid_spec=pltpu.PrefetchScalarGridSpec(
            num_scalar_prefetch=0,
            grid=grid,
            in_specs=[
                pl.BlockSpec((None, C, t), lambda n, j: (n, 0, j)),   # x tile
                pl.BlockSpec((P, C), lambda n, j: (0, 0)),            # w1 (resident)
                pl.BlockSpec((P, 2), lambda n, j: (0, 0)),            # biases
                pl.BlockSpec((P, P), lambda n, j: (0, 0)),            # w2 (resident)
            ],
            out_specs=pl.BlockSpec((None, P, t), lambda n, j: (n, 0, j)),
        ),
        compiler_params=pltpu.CompilerParams(
            dimension_semantics=("parallel", "parallel"),
            vmem_limit_bytes=_VMEM_LIMIT_BYTES,
        ),
    )(x, w1_in, b_in, w2_in)

    return out.reshape(N, P, H, W)


def make_params(key, dim_in, dim_proj):
    """Deterministic synthetic parameters; BN (eval mode) folded into conv1.
    Weights use the PyTorch 1x1-conv layout: (out_channels, in_channels)."""
    k1, k2, k3, k4, k5, k6, k7, k8 = jax.random.split(key, 8)
    w1 = jax.random.normal(k1, (dim_proj, dim_in), jnp.float32) * 0.2
    b1 = jax.random.normal(k2, (dim_proj,), jnp.float32) * 0.1
    gamma = 1.0 + 0.1 * jax.random.normal(k3, (dim_proj,), jnp.float32)
    beta = 0.1 * jax.random.normal(k4, (dim_proj,), jnp.float32)
    run_mean = 0.1 * jax.random.normal(k5, (dim_proj,), jnp.float32)
    run_var = jnp.abs(1.0 + 0.1 * jax.random.normal(k6, (dim_proj,), jnp.float32))
    eps = 1e-5
    w2 = jax.random.normal(k7, (dim_proj, dim_proj), jnp.float32) * 0.1
    b2 = jax.random.normal(k8, (dim_proj,), jnp.float32) * 0.1

    # Fold eval-mode BN into conv1: gamma*(W1 x + b1 - mu)/sqrt(var+eps) + beta.
    scale = gamma / jnp.sqrt(run_var + eps)
    w1_folded = w1 * scale[:, None]
    b1_folded = (b1 - run_mean) * scale + beta
    return w1_folded, b1_folded, w2, b2


def reference_forward(x_nchw, w1, b1, w2, b2):
    """Pure-JAX reference matching the kernel's numerics (bf16 operands, f32 acc)."""
    N, C, H, W = x_nchw.shape
    P = w1.shape[0]
    hp = lax.Precision.HIGHEST
    bf = lambda a: a.astype(jnp.bfloat16).astype(jnp.float32)
    x = bf(x_nchw.reshape(N, C, H * W))
    h = jnp.einsum("pc,nct->npt", bf(w1), x, precision=hp) + b1[None, :, None]
    h = jnp.maximum(h, 0.0)
    y = jnp.einsum("qp,npt->nqt", bf(w2), bf(h), precision=hp) + b2[None, :, None]
    nrm = jnp.sqrt(jnp.sum(y * y, axis=1, keepdims=True))
    y = y / jnp.maximum(nrm, 1e-12)
    return y.reshape(N, P, H, W)


if __name__ == "__main__":
    key = jax.random.PRNGKey(0)
    k_x, k_p = jax.random.split(key)

    N, C, H, W = 2, 4, 16, 16          # small NCHW input, as in the PyTorch module
    dim_proj = 256                     # module default (multiple of 256: clean MXU fit)

    x = jax.random.normal(k_x, (N, C, H, W), jnp.float32)
    w1, b1, w2, b2 = make_params(k_p, C, dim_proj)

    out = projection_head_pallas(x, w1, b1, w2, b2)
    out = jax.block_until_ready(out)
    ref = reference_forward(x, w1, b1, w2, b2)

    assert out.shape == (N, dim_proj, H, W)
    max_err = jnp.max(jnp.abs(out - ref))
    assert jnp.allclose(out, ref, atol=3e-3, rtol=3e-3), f"max abs err {max_err}"

    # Optional bf16 output path (halves the dominant HBM write stream).
    out_bf16 = projection_head_pallas(x, w1, b1, w2, b2, out_dtype=jnp.bfloat16)
    out_bf16 = jax.block_until_ready(out_bf16)
    assert out_bf16.dtype == jnp.bfloat16
    assert jnp.allclose(out_bf16.astype(jnp.float32), ref, atol=2e-2, rtol=2e-2)

    print("KERNEL_OK")
</pallas_src>

<mosaic_0001>
module attributes {stable_mosaic.version = 11 : i64} {
  func.func @_proj_head_kernel(%arg0: i32, %arg1: i32, %arg2: memref<1x4x256xf32, #tpu.memory_space<vmem>>, %arg3: memref<256x4xbf16, #tpu.memory_space<vmem>>, %arg4: memref<256x2xf32, #tpu.memory_space<vmem>>, %arg5: memref<256x256xbf16, #tpu.memory_space<vmem>>, %arg6: memref<1x256x256xf32, #tpu.memory_space<vmem>>) attributes {dimension_semantics = [#tpu.dimension_semantics<parallel>, #tpu.dimension_semantics<parallel>], iteration_bounds = array<i64: 2, 1>, scalar_prefetch = 0 : i64, scratch_operands = 0 : i64, tpu.core_type = #tpu.core_type<tc>, window_params = [{transform_indices = @transform_0, window_bounds = array<i64: 1, 4, 256>}, {pipeline_mode = #tpu.pipeline_mode<synchronous>, transform_indices = @transform_1, window_bounds = array<i64: 256, 4>}, {pipeline_mode = #tpu.pipeline_mode<synchronous>, transform_indices = @transform_2, window_bounds = array<i64: 256, 2>}, {pipeline_mode = #tpu.pipeline_mode<synchronous>, transform_indices = @transform_3, window_bounds = array<i64: 256, 256>}, {transform_indices = @transform_4, window_bounds = array<i64: 1, 256, 256>}]} {
    %c0 = arith.constant 0 : index
    %c0_0 = arith.constant 0 : index
    %0 = vector.load %arg4[%c0, %c0_0] : memref<256x2xf32, #tpu.memory_space<vmem>>, vector<256x1xf32>
    %c0_1 = arith.constant 0 : index
    %c1 = arith.constant 1 : index
    %1 = vector.load %arg4[%c0_1, %c1] : memref<256x2xf32, #tpu.memory_space<vmem>>, vector<256x1xf32>
    %c0_2 = arith.constant 0 : index
    %c0_3 = arith.constant 0 : index
    %c0_4 = arith.constant 0 : index
    %2 = vector.load %arg2[%c0_2, %c0_3, %c0_4] : memref<1x4x256xf32, #tpu.memory_space<vmem>>, vector<1x4x256xf32>
    %3 = vector.shape_cast %2 : vector<1x4x256xf32> to vector<4x256xf32>
    %4 = arith.truncf %3 : vector<4x256xf32> to vector<4x256xbf16>
    %c0_5 = arith.constant 0 : index
    %c0_6 = arith.constant 0 : index
    %5 = vector.load %arg3[%c0_5, %c0_6] : memref<256x4xbf16, #tpu.memory_space<vmem>>, vector<256x4xbf16>
    %cst = arith.constant dense<0.000000e+00> : vector<256x256xf32>
    %6 = tpu.matmul %5, %4, %cst {dimension_numbers = #tpu.dot_dimension_numbers<[1], [0], [0], [1], [0, 0, 1, 1], [], []>} : vector<256x4xbf16>, vector<4x256xbf16>, vector<256x256xf32> -> vector<256x256xf32>
    %7 = vector.broadcast %0 : vector<256x1xf32> to vector<256x256xf32>
    %8 = arith.addf %6, %7 : vector<256x256xf32>
    %cst_7 = arith.constant 0.000000e+00 : f32
    %9 = vector.broadcast %cst_7 : f32 to vector<256x256xf32>
    %10 = arith.maximumf %8, %9 : vector<256x256xf32>
    %c0_8 = arith.constant 0 : index
    %c0_9 = arith.constant 0 : index
    %11 = vector.load %arg5[%c0_8, %c0_9] : memref<256x256xbf16, #tpu.memory_space<vmem>>, vector<256x256xbf16>
    %12 = arith.truncf %10 : vector<256x256xf32> to vector<256x256xbf16>
    %cst_10 = arith.constant dense<0.000000e+00> : vector<256x256xf32>
    %13 = tpu.matmul %11, %12, %cst_10 {dimension_numbers = #tpu.dot_dimension_numbers<[1], [0], [0], [1], [0, 0, 1, 1], [], []>} : vector<256x256xbf16>, vector<256x256xbf16>, vector<256x256xf32> -> vector<256x256xf32>
    %14 = vector.broadcast %1 : vector<256x1xf32> to vector<256x256xf32>
    %15 = arith.addf %13, %14 : vector<256x256xf32>
    %16 = arith.mulf %15, %15 : vector<256x256xf32>
    %cst_11 = arith.constant dense<0.000000e+00> : vector<256xf32>
    %17 = vector.multi_reduction <add>, %16, %cst_11 [0] : vector<256x256xf32> to vector<256xf32>
    %18 = vector.shape_cast %17 : vector<256xf32> to vector<1x256xf32>
    %cst_12 = arith.constant 1.000000e-24 : f32
    %19 = vector.broadcast %cst_12 : f32 to vector<1x256xf32>
    %20 = arith.maximumf %18, %19 : vector<1x256xf32>
    %21 = math.rsqrt %20 : vector<1x256xf32>
    %22 = vector.broadcast %21 : vector<1x256xf32> to vector<256x256xf32>
    %23 = arith.mulf %15, %22 : vector<256x256xf32>
    %c0_13 = arith.constant 0 : index
    %c0_14 = arith.constant 0 : index
    %c0_15 = arith.constant 0 : index
    %24 = vector.load %arg6[%c0_13, %c0_14, %c0_15] : memref<1x256x256xf32, #tpu.memory_space<vmem>>, vector<1x256x256xf32>
    %25 = vector.shape_cast %24 : vector<1x256x256xf32> to vector<256x256xf32>
    %26 = vector.shape_cast %23 : vector<256x256xf32> to vector<1x256x256xf32>
    tpu.vector_store %arg6[%c0_13, %c0_14, %c0_15], %26 {strides = array<i32>} : memref<1x256x256xf32, #tpu.memory_space<vmem>>, vector<1x256x256xf32>,
    return
  }
  func.func @transform_0(%arg0: i32, %arg1: i32) -> (i32, i32, i32) {
    %c0_i32 = arith.constant 0 : i32
    %c0_i32_0 = arith.constant 0 : i32
    return %arg0, %c0_i32, %arg1 : i32, i32, i32
  }
  func.func @transform_1(%arg0: i32, %arg1: i32) -> (i32, i32) {
    %c0_i32 = arith.constant 0 : i32
    %c0_i32_0 = arith.constant 0 : i32
    %c0_i32_1 = arith.constant 0 : i32
    return %c0_i32, %c0_i32_0 : i32, i32
  }
  func.func @transform_2(%arg0: i32, %arg1: i32) -> (i32, i32) {
    %c0_i32 = arith.constant 0 : i32
    %c0_i32_0 = arith.constant 0 : i32
    %c0_i32_1 = arith.constant 0 : i32
    return %c0_i32, %c0_i32_0 : i32, i32
  }
  func.func @transform_3(%arg0: i32, %arg1: i32) -> (i32, i32) {
    %c0_i32 = arith.constant 0 : i32
    %c0_i32_0 = arith.constant 0 : i32
    %c0_i32_1 = arith.constant 0 : i32
    return %c0_i32, %c0_i32_0 : i32, i32
  }
  func.func @transform_4(%arg0: i32, %arg1: i32) -> (i32, i32, i32) {
    %c0_i32 = arith.constant 0 : i32
    %c0_i32_0 = arith.constant 0 : i32
    return %arg0, %c0_i32, %arg1 : i32, i32, i32
  }
}

</mosaic_0001>

<llo_original>
// kernel: projection_head_pallas.1
$region0: #{projection_head_pallas.1}
  #allocation0 [shape = 'u32[]', space=smem, size = 0x4, offset = 0x4, fixed_abs, tag = 'smem constant byte address 0x4 - core index']
  #allocation1 [shape = 'u32[144,128]{1,0:T(1,128)}', space=vmem, size = 0x12000, scoped, tag = 'internal scratch']
  %s0 = inlined_call_operand.vmem [shape: f32[2,4,256], index: 0, kind: input, shape index: {}]
  %s1 = inlined_call_operand.vmem [shape: bf16[256,4], index: 1, kind: input, shape index: {}]
  %s2 = inlined_call_operand.vmem [shape: f32[256,2], index: 2, kind: input, shape index: {}]
  %s3 = inlined_call_operand.vmem [shape: bf16[256,256], index: 3, kind: input, shape index: {}]
  %s4 = inlined_call_operand.vmem [shape: f32[2,256,256], index: 4, kind: output, shape index: {}]
  %s5 = sld [smem:[#allocation0]]
  $region49: #{projection_head_pallas.1} parent=0
    _
  %s7 = ssub.s32 1, %s5
  %s8 = scalar_select 0, %s7, %s5
  loop: start=0, step=1, limit=4
  $region2: #{projection_head_pallas.1} parent=0 // loop_pre_header
    _
  $region3: #{projection_head_pallas.1} parent=0 // loop_header
    %s10 = sphi 0, %s14
    %p11 = scmp.ge.s32.totalorder %s10, 4
    %s17 = sphi 0, %s29
    %s18 = sphi 0, %s25
    %s19 = sphi 0, %s17
    %s20 = sphi 0, %s18
    %s21 = sphi 0, %s19
    %s22 = sphi 0, %s20
    %s34 = sphi 0, %s36
    %s37 = sphi 0, %s34
    %s38 = sphi 0, %s37
    %s54 = sphi 0, %s38
    %s58 = sphi 0, %s58
    %s60 = sphi 0, %s58
    %s61 = sphi 0, %s60
    %s75 = sphi 0, %s61
    %s79 = sphi 0, %s79
    %s81 = sphi 0, %s79
    %s82 = sphi 0, %s81
    %s96 = sphi 0, %s82
    %s100 = sphi 0, %s100
    %s102 = sphi 0, %s100
    %s103 = sphi 0, %s102
    %s117 = sphi 0, %s103
    %s125 = sphi 0, %s127
    %s128 = sphi 0, %s125
    %s129 = sphi 0, %s128
    %s145 = sphi 0, %s129
  $region4: #{projection_head_pallas.1} parent=0 // loop_header_branch
    %13 = sbr.rel (%p11) target = $region8
  $region5: #{projection_head_pallas.1} parent=0 // loop_body
    %s15 = ssub.s32 %s10, 1
    %s16 = ssub.s32 %s10, 2
    %s23 = sadd.s32 1, %s18
    %p24 = scmp.ge.s32.totalorder %s23, 1
    %s25 = scalar_select %p24, 0, %s23
    %s26 = sadd.s32 1, %s17
    %s27 = scalar_select %p24, %s26, %s17
    %p28 = scmp.ge.s32.totalorder %s27, 2
    %s29 = scalar_select %p28, 0, %s27
    %s30 = ssub.s32 %s17, %s29
    %s31 = ssub.s32 %s18, %s25
    %s32 = sor.u32 %s30, %s31
    %p33 = scmp.eq.s32.totalorder %s32, 0
    %s35 = sadd.s32 %s34, 1
    %s36 = scalar_select %p33, %s34, %s35
    %p39 = pneg %p33
    %p40 = scmp.eq.s32.totalorder %s10, 1
    %p41 = por %p39, %p40
    %p42 = scmp.ne.s32.totalorder %s34, %s37
    %p43 = scmp.eq.s32.totalorder %s10, 0
    %p44 = por %p42, %p43
    %p45 = scmp.ne.s32.totalorder %s34, %s37
    %p46 = scmp.eq.s32.totalorder %s15, 1
    %p47 = por %p45, %p46
    %p48 = scmp.ne.s32.totalorder %s37, %s38
    %p49 = scmp.eq.s32.totalorder %s15, 0
    %p50 = por %p48, %p49
    %p51 = scmp.ne.s32.totalorder %s37, %s38
    %p52 = scmp.eq.s32.totalorder %s16, 1
    %p53 = por %p51, %p52
    %p55 = scmp.ne.s32.totalorder %s38, %s54
    %p56 = scmp.eq.s32.totalorder %s16, 0
    %p57 = por %p55, %p56
    %s59 = sadd.s32 %s58, 1
    %p62 = scmp.eq.s32.totalorder %s10, 1
    %p63 = scmp.ne.s32.totalorder %s58, %s60
    %p64 = scmp.eq.s32.totalorder %s10, 0
    %p65 = por %p63, %p64
    %p66 = scmp.ne.s32.totalorder %s58, %s60
    %p67 = scmp.eq.s32.totalorder %s15, 1
    %p68 = por %p66, %p67
    %p69 = scmp.ne.s32.totalorder %s60, %s61
    %p70 = scmp.eq.s32.totalorder %s15, 0
    %p71 = por %p69, %p70
    %p72 = scmp.ne.s32.totalorder %s60, %s61
    %p73 = scmp.eq.s32.totalorder %s16, 1
    %p74 = por %p72, %p73
    %p76 = scmp.ne.s32.totalorder %s61, %s75
    %p77 = scmp.eq.s32.totalorder %s16, 0
    %p78 = por %p76, %p77
    %s80 = sadd.s32 %s79, 1
    %p83 = scmp.eq.s32.totalorder %s10, 1
    %p84 = scmp.ne.s32.totalorder %s79, %s81
    %p85 = scmp.eq.s32.totalorder %s10, 0
    %p86 = por %p84, %p85
    %p87 = scmp.ne.s32.totalorder %s79, %s81
    %p88 = scmp.eq.s32.totalorder %s15, 1
    %p89 = por %p87, %p88
    %p90 = scmp.ne.s32.totalorder %s81, %s82
    %p91 = scmp.eq.s32.totalorder %s15, 0
    %p92 = por %p90, %p91
    %p93 = scmp.ne.s32.totalorder %s81, %s82
    %p94 = scmp.eq.s32.totalorder %s16, 1
    %p95 = por %p93, %p94
    %p97 = scmp.ne.s32.totalorder %s82, %s96
    %p98 = scmp.eq.s32.totalorder %s16, 0
    %p99 = por %p97, %p98
    %s101 = sadd.s32 %s100, 1
    %p104 = scmp.eq.s32.totalorder %s10, 1
    %p105 = scmp.ne.s32.totalorder %s100, %s102
    %p106 = scmp.eq.s32.totalorder %s10, 0
    %p107 = por %p105, %p106
    %p108 = scmp.ne.s32.totalorder %s100, %s102
    %p109 = scmp.eq.s32.totalorder %s15, 1
    %p110 = por %p108, %p109
    %p111 = scmp.ne.s32.totalorder %s102, %s103
    %p112 = scmp.eq.s32.totalorder %s15, 0
    %p113 = por %p111, %p112
    %p114 = scmp.ne.s32.totalorder %s102, %s103
    %p115 = scmp.eq.s32.totalorder %s16, 1
    %p116 = por %p114, %p115
    %p118 = scmp.ne.s32.totalorder %s103, %s117
    %p119 = scmp.eq.s32.totalorder %s16, 0
    %p120 = por %p118, %p119
    %s121 = ssub.s32 %s17, %s29
    %s122 = ssub.s32 %s18, %s25
    %s123 = sor.u32 %s121, %s122
    %p124 = scmp.eq.s32.totalorder %s123, 0
    %s126 = sadd.s32 %s125, 1
    %s127 = scalar_select %p124, %s125, %s126
    %p130 = pneg %p124
    %p131 = scmp.eq.s32.totalorder %s10, 1
    %p132 = por %p130, %p131
    %p133 = scmp.ne.s32.totalorder %s125, %s128
    %p134 = scmp.eq.s32.totalorder %s10, 0
    %p135 = por %p133, %p134
    %p136 = scmp.ne.s32.totalorder %s125, %s128
    %p137 = scmp.eq.s32.totalorder %s15, 1
    %p138 = por %p136, %p137
    %p139 = scmp.ne.s32.totalorder %s128, %s129
    %p140 = scmp.eq.s32.totalorder %s15, 0
    %p141 = por %p139, %p140
    %p142 = scmp.ne.s32.totalorder %s128, %s129
    %p143 = scmp.eq.s32.totalorder %s16, 1
    %p144 = por %p142, %p143
    %p146 = scmp.ne.s32.totalorder %s129, %s145
    %p147 = scmp.eq.s32.totalorder %s16, 0
    %p148 = por %p146, %p147
    %p149 = scmp.le.s32.totalorder 1, %s10
    %p150 = scmp.lt.s32.totalorder %s10, 3
    %p151 = pnand %p149, %p150
    %p152 = pneg %p151
    // Predicated region
    $region9: #{projection_head_pallas.1} parent=5 // pred_check
      _
    $region10: #{projection_head_pallas.1} parent=5 // pred_check_branch
      %154 = sbr.rel (%p151) target = $region12
    $region11: #{projection_head_pallas.1} parent=5 // pred_region
      %s155 = ssub.s32 %s10, 1
      // Predicated region
      $region13: #{projection_head_pallas.1} parent=11 // pred_check
        %p156 = pneg %p71
      $region14: #{projection_head_pallas.1} parent=11 // pred_check_branch
        %158 = sbr.rel (%p156) target = $region16
      $region15: #{projection_head_pallas.1} parent=11 // pred_region
        _
      $region16: #{projection_head_pallas.1} parent=11 // pred_fallthru
        _
      // Predicated region
      $region17: #{projection_head_pallas.1} parent=11 // pred_check
        %p159 = pneg %p92
      $region18: #{projection_head_pallas.1} parent=11 // pred_check_branch
        %161 = sbr.rel (%p159) target = $region20
      $region19: #{projection_head_pallas.1} parent=11 // pred_region
        _
      $region20: #{projection_head_pallas.1} parent=11 // pred_fallthru
        _
      // Predicated region
      $region21: #{projection_head_pallas.1} parent=11 // pred_check
        %p162 = pneg %p113
      $region22: #{projection_head_pallas.1} parent=11 // pred_check_branch
        %164 = sbr.rel (%p162) target = $region24
      $region23: #{projection_head_pallas.1} parent=11 // pred_region
        _
      $region24: #{projection_head_pallas.1} parent=11 // pred_fallthru
        _
    $region12: #{projection_head_pallas.1} parent=5 // pred_fallthru
      _
    %p165 = scmp.lt.s32.totalorder %s10, 2
    // Predicated region
    $region25: #{projection_head_pallas.1} parent=5 // pred_check
      %p166 = pneg %p165
    $region26: #{projection_head_pallas.1} parent=5 // pred_check_branch
      %168 = sbr.rel (%p166) target = $region28
    $region27: #{projection_head_pallas.1} parent=5 // pred_region
      // Predicated region
      $region29: #{projection_head_pallas.1} parent=27 // pred_check
        %p169 = pneg %p44
      $region30: #{projection_head_pallas.1} parent=27 // pred_check_branch
        %171 = sbr.rel (%p169) target = $region32
      $region31: #{projection_head_pallas.1} parent=27 // pred_region
        %s172 = smul.u32 2, %s18
        %p173 = scmp.lt.s32.totalorder %s17, 1
        %s174 = scalar_select %p173, %s17, 1
        %p175 = scmp.lt.s32.totalorder %s172, 1
        %s176 = scalar_select %p175, %s172, 1
        %s177 = smul.addr %s174, 2
        %s178 = sadd.s32 %s176, %s177
        %s179 = smul.addr %s178, 4
        %s180 = scalar_lea.vmem %s0, %s179
        %s181 = smul.u32 2, %s18
      $region32: #{projection_head_pallas.1} parent=27 // pred_fallthru
        _
    $region28: #{projection_head_pallas.1} parent=5 // pred_fallthru
      _
    %p182 = scmp.le.s32.totalorder 1, %s10
    %p183 = scmp.lt.s32.totalorder %s10, 3
    %p184 = pnand %p182, %p183
    %p185 = pneg %p184
    // Predicated region
    $region33: #{projection_head_pallas.1} parent=5 // pred_check
      _
    $region34: #{projection_head_pallas.1} parent=5 // pred_check_branch
      %187 = sbr.rel (%p184) target = $region36
    $region35: #{projection_head_pallas.1} parent=5 // pred_region
      %s188 = ssub.s32 %s10, 1
      %s189 = smul.u32 2, %s20
      %p190 = scmp.lt.s32.totalorder %s19, 1
      %s191 = scalar_select %p190, %s19, 1
      %p192 = scmp.lt.s32.totalorder %s189, 1
      %s193 = scalar_select %p192, %s189, 1
      %s194 = smul.addr %s191, 2
      %s195 = sadd.s32 %s193, %s194
      %s196 = smul.addr %s195, 4
      %s197 = scalar_lea.vmem %s0, %s196
      %p198 = pneg %p50
      %p199 = pneg %p47
      %p200 = pneg %p71
      %p201 = pneg %p68
      %p202 = pneg %p92
      %p203 = pneg %p89
      %p204 = pneg %p113
      %p205 = pneg %p110
      %p206 = pneg %p141
      %p207 = pneg %p138
      %s208 = smul.u32 2, %s20
      %p209 = scmp.lt.s32.totalorder %s19, 1
      %s210 = scalar_select %p209, %s19, 1
      %p211 = scmp.lt.s32.totalorder %s208, 1
      %s212 = scalar_select %p211, %s208, 1
      %s213 = smul.addr %s210, 64
      %s214 = sadd.s32 %s212, %s213
      %s215 = smul.addr %s214, 8
      %s216 = scalar_lea.vmem %s4, %s215
      %s217 = smul.u32 2, %s20
      %p218 = scmp.lt.s32.totalorder %s19, 1
      %s219 = scalar_select %p218, %s19, 1
      %p220 = scmp.lt.s32.totalorder %s217, 1
      %s221 = scalar_select %p220, %s217, 1
      %s222 = smul.addr %s219, 2
      %s223 = sadd.s32 %s221, %s222
      %s224 = smul.addr %s223, 4
      %s225 = scalar_lea.vmem %s0, %s224
      %s226 = smul.u32 2, %s20
      %s227 = smul.u32 2, %s20
      %p228 = scmp.lt.s32.totalorder %s19, 1
      %s229 = scalar_select %p228, %s19, 1
      %p230 = scmp.lt.s32.totalorder %s227, 1
      %s231 = scalar_select %p230, %s227, 1
      %s232 = smul.addr %s229, 64
      %s233 = sadd.s32 %s231, %s232
      %s234 = smul.addr %s233, 8
      %s235 = scalar_lea.vmem %s4, %s234
      %s236 = smul.u32 2, %s20
      %v238 = vld [vmem:[%s2] sm:$0xff]
      %v239 = vld [vmem:[%s2 + $0x8] sm:$0xff]
      %v240 = vld [vmem:[%s2 + $0x10] sm:$0xff]
      %v241 = vld [vmem:[%s2 + $0x18] sm:$0xff]
      %v242 = vld [vmem:[%s2 + $0x20] sm:$0xff]
      %v243 = vld [vmem:[%s2 + $0x28] sm:$0xff]
      %v244 = vld [vmem:[%s2 + $0x30] sm:$0xff]
      %v245 = vld [vmem:[%s2 + $0x38] sm:$0xff]
      %v246 = vld [vmem:[%s2 + $0x40] sm:$0xff]
      %v247 = vld [vmem:[%s2 + $0x48] sm:$0xff]
      %v248 = vld [vmem:[%s2 + $0x50] sm:$0xff]
      %v249 = vld [vmem:[%s2 + $0x58] sm:$0xff]
      %v250 = vld [vmem:[%s2 + $0x60] sm:$0xff]
      %v251 = vld [vmem:[%s2 + $0x68] sm:$0xff]
      %v252 = vld [vmem:[%s2 + $0x70] sm:$0xff]
      %v253 = vld [vmem:[%s2 + $0x78] sm:$0xff]
      %v254 = vld [vmem:[%s2 + $0x80] sm:$0xff]
      %v255 = vld [vmem:[%s2 + $0x88] sm:$0xff]
      %v256 = vld [vmem:[%s2 + $0x90] sm:$0xff]
      %v257 = vld [vmem:[%s2 + $0x98] sm:$0xff]
      %v258 = vld [vmem:[%s2 + $0xa0] sm:$0xff]
      %v259 = vld [vmem:[%s2 + $0xa8] sm:$0xff]
      %v260 = vld [vmem:[%s2 + $0xb0] sm:$0xff]
      %v261 = vld [vmem:[%s2 + $0xb8] sm:$0xff]
      %v262 = vld [vmem:[%s2 + $0xc0] sm:$0xff]
      %v263 = vld [vmem:[%s2 + $0xc8] sm:$0xff]
      %v264 = vld [vmem:[%s2 + $0xd0] sm:$0xff]
      %v265 = vld [vmem:[%s2 + $0xd8] sm:$0xff]
      %v266 = vld [vmem:[%s2 + $0xe0] sm:$0xff]
      %v267 = vld [vmem:[%s2 + $0xe8] sm:$0xff]
      %v268 = vld [vmem:[%s2 + $0xf0] sm:$0xff]
      %v269 = vld [vmem:[%s2 + $0xf8] sm:$0xff]
      %v270 = vld [vmem:[%s225] sm:$0xff]
      %v272 = vcombine.high %v270, %v270
      %v274 = vpack.c.bf16 %v270, %v270
      %v275 = vpack.c.bf16 %v272, %v272
      %v276 = vld [vmem:[%s1] sm:$0xf]
      %v277 = vld [vmem:[%s1 + $0x4] sm:$0xf]
      %v278 = vld [vmem:[%s1 + $0x8] sm:$0xf]
      %v279 = vld [vmem:[%s1 + $0xc] sm:$0xf]
      %v280 = vld [vmem:[%s1 + $0x10] sm:$0xf]
      %v281 = vld [vmem:[%s1 + $0x14] sm:$0xf]
      %v282 = vld [vmem:[%s1 + $0x18] sm:$0xf]
      %v283 = vld [vmem:[%s1 + $0x1c] sm:$0xf]
      %v284 = vld [vmem:[%s1 + $0x20] sm:$0xf]
      %v285 = vld [vmem:[%s1 + $0x24] sm:$0xf]
      %v286 = vld [vmem:[%s1 + $0x28] sm:$0xf]
      %v287 = vld [vmem:[%s1 + $0x2c] sm:$0xf]
      %v288 = vld [vmem:[%s1 + $0x30] sm:$0xf]
      %v289 = vld [vmem:[%s1 + $0x34] sm:$0xf]
      %v290 = vld [vmem:[%s1 + $0x38] sm:$0xf]
      %v291 = vld [vmem:[%s1 + $0x3c] sm:$0xf]
      %v292 = vld [vmem:[%s1 + $0x40] sm:$0xf]
      %v293 = vld [vmem:[%s1 + $0x44] sm:$0xf]
      %v294 = vld [vmem:[%s1 + $0x48] sm:$0xf]
      %v295 = vld [vmem:[%s1 + $0x4c] sm:$0xf]
      %v296 = vld [vmem:[%s1 + $0x50] sm:$0xf]
      %v297 = vld [vmem:[%s1 + $0x54] sm:$0xf]
      %v298 = vld [vmem:[%s1 + $0x58] sm:$0xf]
      %v299 = vld [vmem:[%s1 + $0x5c] sm:$0xf]
      %v300 = vld [vmem:[%s1 + $0x60] sm:$0xf]
      %v301 = vld [vmem:[%s1 + $0x64] sm:$0xf]
      %v302 = vld [vmem:[%s1 + $0x68] sm:$0xf]
      %v303 = vld [vmem:[%s1 + $0x6c] sm:$0xf]
      %v304 = vld [vmem:[%s1 + $0x70] sm:$0xf]
      %v305 = vld [vmem:[%s1 + $0x74] sm:$0xf]
      %v306 = vld [vmem:[%s1 + $0x78] sm:$0xf]
      %v307 = vld [vmem:[%s1 + $0x7c] sm:$0xf]
      %309 = vset.pattern.permute.xlu0 0
      %310 = vperm.xlu0 %309, %v238
      %v311 = vpop.permute.xlu0 %310
      %314 = vset.pattern.permute.xlu0 0
      %315 = vperm.xlu0 %314, %v239
      %v316 = vpop.permute.xlu0 %315
      %319 = vset.pattern.permute.xlu0 0
      %320 = vperm.xlu0 %319, %v240
      %v321 = vpop.permute.xlu0 %320
      %324 = vset.pattern.permute.xlu0 0
      %325 = vperm.xlu0 %324, %v241
      %v326 = vpop.permute.xlu0 %325
      %329 = vset.pattern.permute.xlu0 0
      %330 = vperm.xlu0 %329, %v242
      %v331 = vpop.permute.xlu0 %330
      %334 = vset.pattern.permute.xlu0 0
      %335 = vperm.xlu0 %334, %v243
      %v336 = vpop.permute.xlu0 %335
      %339 = vset.pattern.permute.xlu0 0
      %340 = vperm.xlu0 %339, %v244
      %v341 = vpop.permute.xlu0 %340
      %344 = vset.pattern.permute.xlu0 0
      %345 = vperm.xlu0 %344, %v245
      %v346 = vpop.permute.xlu0 %345
      %349 = vset.pattern.permute.xlu0 0
      %350 = vperm.xlu0 %349, %v246
      %v351 = vpop.permute.xlu0 %350
      %354 = vset.pattern.permute.xlu0 0
      %355 = vperm.xlu0 %354, %v247
      %v356 = vpop.permute.xlu0 %355
      %359 = vset.pattern.permute.xlu0 0
      %360 = vperm.xlu0 %359, %v248
      %v361 = vpop.permute.xlu0 %360
      %364 = vset.pattern.permute.xlu0 0
      %365 = vperm.xlu0 %364, %v249
      %v366 = vpop.permute.xlu0 %365
      %369 = vset.pattern.permute.xlu0 0
      %370 = vperm.xlu0 %369, %v250
      %v371 = vpop.permute.xlu0 %370
      %374 = vset.pattern.permute.xlu0 0
      %375 = vperm.xlu0 %374, %v251
      %v376 = vpop.permute.xlu0 %375
      %379 = vset.pattern.permute.xlu0 0
      %380 = vperm.xlu0 %379, %v252
      %v381 = vpop.permute.xlu0 %380
      %384 = vset.pattern.permute.xlu0 0
      %385 = vperm.xlu0 %384, %v253
      %v386 = vpop.permute.xlu0 %385
      %389 = vset.pattern.permute.xlu0 0
      %390 = vperm.xlu0 %389, %v254
      %v391 = vpop.permute.xlu0 %390
      %394 = vset.pattern.permute.xlu0 0
      %395 = vperm.xlu0 %394, %v255
      %v396 = vpop.permute.xlu0 %395
      %399 = vset.pattern.permute.xlu0 0
      %400 = vperm.xlu0 %399, %v256
      %v401 = vpop.permute.xlu0 %400
      %404 = vset.pattern.permute.xlu0 0
      %405 = vperm.xlu0 %404, %v257
      %v406 = vpop.permute.xlu0 %405
      %409 = vset.pattern.permute.xlu0 0
      %410 = vperm.xlu0 %409, %v258
      %v411 = vpop.permute.xlu0 %410
      %414 = vset.pattern.permute.xlu0 0
      %415 = vperm.xlu0 %414, %v259
      %v416 = vpop.permute.xlu0 %415
      %419 = vset.pattern.permute.xlu0 0
      %420 = vperm.xlu0 %419, %v260
      %v421 = vpop.permute.xlu0 %420
      %424 = vset.pattern.permute.xlu0 0
      %425 = vperm.xlu0 %424, %v261
      %v426 = vpop.permute.xlu0 %425
      %429 = vset.pattern.permute.xlu0 0
      %430 = vperm.xlu0 %429, %v262
      %v431 = vpop.permute.xlu0 %430
      %434 = vset.pattern.permute.xlu0 0
      %435 = vperm.xlu0 %434, %v263
      %v436 = vpop.permute.xlu0 %435
      %439 = vset.pattern.permute.xlu0 0
      %440 = vperm.xlu0 %439, %v264
      %v441 = vpop.permute.xlu0 %440
      %444 = vset.pattern.permute.xlu0 0
      %445 = vperm.xlu0 %444, %v265
      %v446 = vpop.permute.xlu0 %445
      %449 = vset.pattern.permute.xlu0 0
      %450 = vperm.xlu0 %449, %v266
      %v451 = vpop.permute.xlu0 %450
      %454 = vset.pattern.permute.xlu0 0
      %455 = vperm.xlu0 %454, %v267
      %v456 = vpop.permute.xlu0 %455
      %459 = vset.pattern.permute.xlu0 0
      %460 = vperm.xlu0 %459, %v268
      %v461 = vpop.permute.xlu0 %460
      %464 = vset.pattern.permute.xlu0 0
      %465 = vperm.xlu0 %464, %v269
      %v466 = vpop.permute.xlu0 %465
      %v500 = vunpack.c.l.b16 %v276
      %v501 = vunpack.c.l.b16 %v277
      %v502 = vunpack.c.l.b16 %v278
      %v503 = vunpack.c.l.b16 %v279
      %v504 = vunpack.c.l.b16 %v280
      %v505 = vunpack.c.l.b16 %v281
      %v506 = vunpack.c.l.b16 %v282
      %v507 = vunpack.c.l.b16 %v283
      %v508 = vunpack.c.l.b16 %v284
      %v509 = vunpack.c.l.b16 %v285
      %v510 = vunpack.c.l.b16 %v286
      %v511 = vunpack.c.l.b16 %v287
      %v512 = vunpack.c.l.b16 %v288
      %v513 = vunpack.c.l.b16 %v289
      %v514 = vunpack.c.l.b16 %v290
      %v515 = vunpack.c.l.b16 %v291
      %v516 = vunpack.c.l.b16 %v292
      %v517 = vunpack.c.l.b16 %v293
      %v518 = vunpack.c.l.b16 %v294
      %v519 = vunpack.c.l.b16 %v295
      %v520 = vunpack.c.l.b16 %v296
      %v521 = vunpack.c.l.b16 %v297
      %v522 = vunpack.c.l.b16 %v298
      %v523 = vunpack.c.l.b16 %v299
      %v524 = vunpack.c.l.b16 %v300
      %v525 = vunpack.c.l.b16 %v301
      %v526 = vunpack.c.l.b16 %v302
      %v527 = vunpack.c.l.b16 %v303
      %v528 = vunpack.c.l.b16 %v304
      %v529 = vunpack.c.l.b16 %v305
      %v530 = vunpack.c.l.b16 %v306
      %v531 = vunpack.c.l.b16 %v307
      %v532 = vpack.c.b16 %v501, %v500
      %v533 = vpack.c.b16 %v503, %v502
      %v534 = vpack.c.b16 %v505, %v504
      %v535 = vpack.c.b16 %v507, %v506
      %v536 = vpack.c.b16 %v509, %v508
      %v537 = vpack.c.b16 %v511, %v510
      %v538 = vpack.c.b16 %v513, %v512
      %v539 = vpack.c.b16 %v515, %v514
      %v540 = vpack.c.b16 %v517, %v516
      %v541 = vpack.c.b16 %v519, %v518
      %v542 = vpack.c.b16 %v521, %v520
      %v543 = vpack.c.b16 %v523, %v522
      %v544 = vpack.c.b16 %v525, %v524
      %v545 = vpack.c.b16 %v527, %v526
      %v546 = vpack.c.b16 %v529, %v528
      %v547 = vpack.c.b16 %v531, %v530
      %vm548 = vcmask 31744
      %v550 = vsel %vm548, %v532, 0
      %v553 = vsel %vm548, %v533, 0
      %v556 = vsel %vm548, %v534, 0
      %v559 = vsel %vm548, %v535, 0
      %v562 = vsel %vm548, %v536, 0
      %v565 = vsel %vm548, %v537, 0
      %v568 = vsel %vm548, %v538, 0
      %v571 = vsel %vm548, %v539, 0
      %v574 = vsel %vm548, %v540, 0
      %v577 = vsel %vm548, %v541, 0
      %v580 = vsel %vm548, %v542, 0
      %v583 = vsel %vm548, %v543, 0
      %v586 = vsel %vm548, %v544, 0
      %v589 = vsel %vm548, %v545, 0
      %v592 = vsel %vm548, %v546, 0
      %v595 = vsel %vm548, %v547, 0
      %vm597 = vcmask 1041408
      %v599 = vsel %vm597, %v274, 0
      %v602 = vsel %vm597, %v275, 0
      %604 = vmatprep.subr.bf16.mxu0 %v602
      %605 = vmatpush1.bf16.msra.mxu0 %v599
      %606 = vmatprep.subr.bf16.mxu0 0
      %607 = vmatpush1.bf16.msra.mxu0 0
      %608 = vmatprep.subr.bf16.mxu0 0
      %609 = vmatpush1.bf16.msra.mxu0 0
      %610 = vmatprep.subr.bf16.mxu0 0
      %611 = vmatpush1.bf16.msra.mxu0 0
      %612 = vmatprep.subr.bf16.mxu0 0
      %613 = vmatpush1.bf16.msra.mxu0 0
      %614 = vmatprep.subr.bf16.mxu0 0
      %615 = vmatpush1.bf16.msra.mxu0 0
      %616 = vmatprep.subr.bf16.mxu0 0
      %617 = vmatpush1.bf16.msra.mxu0 0
      %618 = vmatprep.subr.bf16.mxu0 0
      %619 = vmatpush1.bf16.msra.mxu0 0
      %620 = vmatprep.subr.bf16.mxu0 0
      %621 = vmatpush1.bf16.msra.mxu0 0
      %622 = vmatprep.subr.bf16.mxu0 0
      %623 = vmatpush1.bf16.msra.mxu0 0
      %624 = vmatprep.subr.bf16.mxu0 0
      %625 = vmatpush1.bf16.msra.mxu0 0
      %626 = vmatprep.subr.bf16.mxu0 0
      %627 = vmatpush1.bf16.msra.mxu0 0
      %628 = vmatprep.subr.bf16.mxu0 0
      %629 = vmatpush1.bf16.msra.mxu0 0
      %630 = vmatprep.subr.bf16.mxu0 0
      %631 = vmatpush1.bf16.msra.mxu0 0
      %632 = vmatprep.subr.bf16.mxu0 0
      %633 = vmatpush1.bf16.msra.mxu0 0
      %634 = vmatprep.subr.bf16.mxu0 0
      %635 = vmatpush1.bf16.msra.mxu0 0
      %636 = vmatprep.mubr.bf16.mxu0 0
      %637 = vmatmul.mubr.bf16.gmra.mrb[0].mxu0 %v550
      %v638 = vpop.f32.mrb[0].mxu0
      %v639 = vadd.f32 %v311, %v638
      %v640 = vpop.f32.mrb[0].mxu0
      %v641 = vadd.f32 %v311, %v640
      %v642 = vpop.f32.mrb[0].mxu0
      %v643 = vadd.f32 %v316, %v642
      %v644 = vpop.f32.mrb[0].mxu0
      %v645 = vadd.f32 %v316, %v644
      %646 = vmatprep.mubr.bf16.mxu0 0
      %647 = vmatmul.mubr.bf16.gmra.mrb[0].mxu0 %v553
      %v648 = vpop.f32.mrb[0].mxu0
      %v649 = vadd.f32 %v321, %v648
      %v650 = vpop.f32.mrb[0].mxu0
      %v651 = vadd.f32 %v321, %v650
      %v652 = vpop.f32.mrb[0].mxu0
      %v653 = vadd.f32 %v326, %v652
      %v654 = vpop.f32.mrb[0].mxu0
      %v655 = vadd.f32 %v326, %v654
      %656 = vmatprep.mubr.bf16.mxu0 0
      %657 = vmatmul.mubr.bf16.gmra.mrb[0].mxu0 %v556
      %v658 = vpop.f32.mrb[0].mxu0
      %v659 = vadd.f32 %v331, %v658
      %v660 = vpop.f32.mrb[0].mxu0
      %v661 = vadd.f32 %v331, %v660
      %v662 = vpop.f32.mrb[0].mxu0
      %v663 = vadd.f32 %v336, %v662
      %v664 = vpop.f32.mrb[0].mxu0
      %v665 = vadd.f32 %v336, %v664
      %666 = vmatprep.mubr.bf16.mxu0 0
      %667 = vmatmul.mubr.bf16.gmra.mrb[0].mxu0 %v559
      %v668 = vpop.f32.mrb[0].mxu0
      %v669 = vadd.f32 %v341, %v668
      %v670 = vpop.f32.mrb[0].mxu0
      %v671 = vadd.f32 %v341, %v670
      %v672 = vpop.f32.mrb[0].mxu0
      %v673 = vadd.f32 %v346, %v672
      %v674 = vpop.f32.mrb[0].mxu0
      %v675 = vadd.f32 %v346, %v674
      %676 = vmatprep.mubr.bf16.mxu0 0
      %677 = vmatmul.mubr.bf16.gmra.mrb[0].mxu0 %v562
      %v678 = vpop.f32.mrb[0].mxu0
      %v679 = vadd.f32 %v351, %v678
      %v680 = vpop.f32.mrb[0].mxu0
      %v681 = vadd.f32 %v351, %v680
      %v682 = vpop.f32.mrb[0].mxu0
      %v683 = vadd.f32 %v356, %v682
      %v684 = vpop.f32.mrb[0].mxu0
      %v685 = vadd.f32 %v356, %v684
      %686 = vmatprep.mubr.bf16.mxu0 0
      %687 = vmatmul.mubr.bf16.gmra.mrb[0].mxu0 %v565
      %v688 = vpop.f32.mrb[0].mxu0
      %v689 = vadd.f32 %v361, %v688
      %v690 = vpop.f32.mrb[0].mxu0
      %v691 = vadd.f32 %v361, %v690
      %v692 = vpop.f32.mrb[0].mxu0
      %v693 = vadd.f32 %v366, %v692
      %v694 = vpop.f32.mrb[0].mxu0
      %v695 = vadd.f32 %v366, %v694
      %696 = vmatprep.mubr.bf16.mxu0 0
      %697 = vmatmul.mubr.bf16.gmra.mrb[0].mxu0 %v568
      %v698 = vpop.f32.mrb[0].mxu0
      %v699 = vadd.f32 %v371, %v698
      %v700 = vpop.f32.mrb[0].mxu0
      %v701 = vadd.f32 %v371, %v700
      %v702 = vpop.f32.mrb[0].mxu0
      %v703 = vadd.f32 %v376, %v702
      %v704 = vpop.f32.mrb[0].mxu0
      %v705 = vadd.f32 %v376, %v704
      %706 = vmatprep.mubr.bf16.mxu0 0
      %707 = vmatmul.mubr.bf16.gmra.mrb[0].mxu0 %v571
      %v708 = vpop.f32.mrb[0].mxu0
      %v709 = vadd.f32 %v381, %v708
      %v710 = vpop.f32.mrb[0].mxu0
      %v711 = vadd.f32 %v381, %v710
      %v712 = vpop.f32.mrb[0].mxu0
      %v713 = vadd.f32 %v386, %v712
      %v714 = vpop.f32.mrb[0].mxu0
      %v715 = vadd.f32 %v386, %v714
      %716 = vmatprep.mubr.bf16.mxu0 0
      %717 = vmatmul.mubr.bf16.gmra.mrb[0].mxu0 %v574
      %v718 = vpop.f32.mrb[0].mxu0
      %v719 = vadd.f32 %v391, %v718
      %v720 = vpop.f32.mrb[0].mxu0
      %v721 = vadd.f32 %v391, %v720
      %v722 = vpop.f32.mrb[0].mxu0
      %v723 = vadd.f32 %v396, %v722
      %v724 = vpop.f32.mrb[0].mxu0
      %v725 = vadd.f32 %v396, %v724
      %726 = vmatprep.mubr.bf16.mxu0 0
      %727 = vmatmul.mubr.bf16.gmra.mrb[0].mxu0 %v577
      %v728 = vpop.f32.mrb[0].mxu0
      %v729 = vadd.f32 %v401, %v728
      %v730 = vpop.f32.mrb[0].mxu0
      %v731 = vadd.f32 %v401, %v730
      %v732 = vpop.f32.mrb[0].mxu0
      %v733 = vadd.f32 %v406, %v732
      %v734 = vpop.f32.mrb[0].mxu0
      %v735 = vadd.f32 %v406, %v734
      %736 = vmatprep.mubr.bf16.mxu0 0
      %737 = vmatmul.mubr.bf16.gmra.mrb[0].mxu0 %v580
      %v738 = vpop.f32.mrb[0].mxu0
      %v739 = vadd.f32 %v411, %v738
      %v740 = vpop.f32.mrb[0].mxu0
      %v741 = vadd.f32 %v411, %v740
      %v742 = vpop.f32.mrb[0].mxu0
      %v743 = vadd.f32 %v416, %v742
      %v744 = vpop.f32.mrb[0].mxu0
      %v745 = vadd.f32 %v416, %v744
      %746 = vmatprep.mubr.bf16.mxu0 0
      %747 = vmatmul.mubr.bf16.gmra.mrb[0].mxu0 %v583
      %v748 = vpop.f32.mrb[0].mxu0
      %v749 = vadd.f32 %v421, %v748
      %v750 = vpop.f32.mrb[0].mxu0
      %v751 = vadd.f32 %v421, %v750
      %v752 = vpop.f32.mrb[0].mxu0
      %v753 = vadd.f32 %v426, %v752
      %v754 = vpop.f32.mrb[0].mxu0
      %v755 = vadd.f32 %v426, %v754
      %756 = vmatprep.mubr.bf16.mxu0 0
      %757 = vmatmul.mubr.bf16.gmra.mrb[0].mxu0 %v586
      %v758 = vpop.f32.mrb[0].mxu0
      %v759 = vadd.f32 %v431, %v758
      %v760 = vpop.f32.mrb[0].mxu0
      %v761 = vadd.f32 %v431, %v760
      %v762 = vpop.f32.mrb[0].mxu0
      %v763 = vadd.f32 %v436, %v762
      %v764 = vpop.f32.mrb[0].mxu0
      %v765 = vadd.f32 %v436, %v764
      %766 = vmatprep.mubr.bf16.mxu0 0
      %767 = vmatmul.mubr.bf16.gmra.mrb[0].mxu0 %v589
      %v768 = vpop.f32.mrb[0].mxu0
      %v769 = vadd.f32 %v441, %v768
      %v770 = vpop.f32.mrb[0].mxu0
      %v771 = vadd.f32 %v441, %v770
      %v772 = vpop.f32.mrb[0].mxu0
      %v773 = vadd.f32 %v446, %v772
      %v774 = vpop.f32.mrb[0].mxu0
      %v775 = vadd.f32 %v446, %v774
      %776 = vmatprep.mubr.bf16.mxu0 0
      %777 = vmatmul.mubr.bf16.gmra.mrb[0].mxu0 %v592
      %v778 = vpop.f32.mrb[0].mxu0
      %v779 = vadd.f32 %v451, %v778
      %v780 = vpop.f32.mrb[0].mxu0
      %v781 = vadd.f32 %v451, %v780
      %v782 = vpop.f32.mrb[0].mxu0
      %v783 = vadd.f32 %v456, %v782
      %v784 = vpop.f32.mrb[0].mxu0
      %v785 = vadd.f32 %v456, %v784
      %786 = vmatprep.mubr.bf16.mxu0 0
      %787 = vmatmul.mubr.bf16.gmra.mrb[0].mxu0 %v595
      %v788 = vpop.f32.mrb[0].mxu0
      %v789 = vadd.f32 %v461, %v788
      %v790 = vpop.f32.mrb[0].mxu0
      %v791 = vadd.f32 %v461, %v790
      %v792 = vpop.f32.mrb[0].mxu0
      %v793 = vadd.f32 %v466, %v792
      %v794 = vpop.f32.mrb[0].mxu0
      %v795 = vadd.f32 %v466, %v794
      %796 = vdwg.mxu0
      %v797 = vmax.f32 %v639, 0.0
      %v798 = vmax.f32 %v641, 0.0
      %v799 = vmax.f32 %v643, 0.0
      %v800 = vmax.f32 %v645, 0.0
      %v801 = vmax.f32 %v649, 0.0
      %v802 = vmax.f32 %v651, 0.0
      %v803 = vmax.f32 %v653, 0.0
      %v804 = vmax.f32 %v655, 0.0
      %v805 = vmax.f32 %v659, 0.0
      %v806 = vmax.f32 %v661, 0.0
      %v807 = vmax.f32 %v663, 0.0
      %v808 = vmax.f32 %v665, 0.0
      %v809 = vmax.f32 %v669, 0.0
      %v810 = vmax.f32 %v671, 0.0
      %v811 = vmax.f32 %v673, 0.0
      %v812 = vmax.f32 %v675, 0.0
      %v813 = vmax.f32 %v679, 0.0
      %v814 = vmax.f32 %v681, 0.0
      %v815 = vmax.f32 %v683, 0.0
      %v816 = vmax.f32 %v685, 0.0
      %v817 = vmax.f32 %v689, 0.0
      %v818 = vmax.f32 %v691, 0.0
      %v819 = vmax.f32 %v693, 0.0
      %v820 = vmax.f32 %v695, 0.0
      %v821 = vmax.f32 %v699, 0.0
      %v822 = vmax.f32 %v701, 0.0
      %v823 = vmax.f32 %v703, 0.0
      %v824 = vmax.f32 %v705, 0.0
      %v825 = vmax.f32 %v709, 0.0
      %v826 = vmax.f32 %v711, 0.0
      %v827 = vmax.f32 %v713, 0.0
      %v828 = vmax.f32 %v715, 0.0
      %v829 = vmax.f32 %v719, 0.0
      %v830 = vmax.f32 %v721, 0.0
      %v831 = vmax.f32 %v723, 0.0
      %v832 = vmax.f32 %v725, 0.0
      %v833 = vmax.f32 %v729, 0.0
      %v834 = vmax.f32 %v731, 0.0
      %v835 = vmax.f32 %v733, 0.0
      %v836 = vmax.f32 %v735, 0.0
      %v837 = vmax.f32 %v739, 0.0
      %v838 = vmax.f32 %v741, 0.0
      %v839 = vmax.f32 %v743, 0.0
      %v840 = vmax.f32 %v745, 0.0
      %v841 = vmax.f32 %v749, 0.0
      %v842 = vmax.f32 %v751, 0.0
      %v843 = vmax.f32 %v753, 0.0
      %v844 = vmax.f32 %v755, 0.0
      %v845 = vmax.f32 %v759, 0.0
      %v846 = vmax.f32 %v761, 0.0
      %v847 = vmax.f32 %v763, 0.0
      %v848 = vmax.f32 %v765, 0.0
      %v849 = vmax.f32 %v769, 0.0
      %v850 = vmax.f32 %v771, 0.0
      %v851 = vmax.f32 %v773, 0.0
      %v852 = vmax.f32 %v775, 0.0
      %v853 = vmax.f32 %v779, 0.0
      %v854 = vmax.f32 %v781, 0.0
      %v855 = vmax.f32 %v783, 0.0
      %v856 = vmax.f32 %v785, 0.0
      %v857 = vmax.f32 %v789, 0.0
      %v858 = vmax.f32 %v791, 0.0
      %v859 = vmax.f32 %v793, 0.0
      %v860 = vmax.f32 %v795, 0.0
      %v861 = vld [vmem:[%s3] sm:$0xff]
      %v862 = vld [vmem:[%s3 + $0x8] sm:$0xff]
      %v863 = vld [vmem:[%s3 + $0x10] sm:$0xff]
      %v864 = vld [vmem:[%s3 + $0x18] sm:$0xff]
      %v865 = vld [vmem:[%s3 + $0x20] sm:$0xff]
      %v866 = vld [vmem:[%s3 + $0x28] sm:$0xff]
      %v867 = vld [vmem:[%s3 + $0x30] sm:$0xff]
      %v868 = vld [vmem:[%s3 + $0x38] sm:$0xff]
      %v869 = vld [vmem:[%s3 + $0x40] sm:$0xff]
      %v870 = vld [vmem:[%s3 + $0x48] sm:$0xff]
      %v871 = vld [vmem:[%s3 + $0x50] sm:$0xff]
      %v872 = vld [vmem:[%s3 + $0x58] sm:$0xff]
      %v873 = vld [vmem:[%s3 + $0x60] sm:$0xff]
      %v874 = vld [vmem:[%s3 + $0x68] sm:$0xff]
      %v875 = vld [vmem:[%s3 + $0x70] sm:$0xff]
      %v876 = vld [vmem:[%s3 + $0x78] sm:$0xff]
      %v877 = vld [vmem:[%s3 + $0x80] sm:$0xff]
      %v878 = vld [vmem:[%s3 + $0x88] sm:$0xff]
      %v879 = vld [vmem:[%s3 + $0x90] sm:$0xff]
      %v880 = vld [vmem:[%s3 + $0x98] sm:$0xff]
      %v881 = vld [vmem:[%s3 + $0xa0] sm:$0xff]
      %v882 = vld [vmem:[%s3 + $0xa8] sm:$0xff]
      %v883 = vld [vmem:[%s3 + $0xb0] sm:$0xff]
      %v884 = vld [vmem:[%s3 + $0xb8] sm:$0xff]
      %v885 = vld [vmem:[%s3 + $0xc0] sm:$0xff]
      %v886 = vld [vmem:[%s3 + $0xc8] sm:$0xff]
      %v887 = vld [vmem:[%s3 + $0xd0] sm:$0xff]
      %v888 = vld [vmem:[%s3 + $0xd8] sm:$0xff]
      %v889 = vld [vmem:[%s3 + $0xe0] sm:$0xff]
      %v890 = vld [vmem:[%s3 + $0xe8] sm:$0xff]
      %v891 = vld [vmem:[%s3 + $0xf0] sm:$0xff]
      %v892 = vld [vmem:[%s3 + $0xf8] sm:$0xff]
      %v893 = vpack.c.bf16 %v799, %v797
      %v894 = vpack.c.bf16 %v800, %v798
      %v895 = vpack.c.bf16 %v803, %v801
      %v896 = vpack.c.bf16 %v804, %v802
      %v897 = vpack.c.bf16 %v807, %v805
      %v898 = vpack.c.bf16 %v808, %v806
      %v899 = vpack.c.bf16 %v811, %v809
      %v900 = vpack.c.bf16 %v812, %v810
      %v901 = vpack.c.bf16 %v815, %v813
      %v902 = vpack.c.bf16 %v816, %v814
      %v903 = vpack.c.bf16 %v819, %v817
      %v904 = vpack.c.bf16 %v820, %v818
      %v905 = vpack.c.bf16 %v823, %v821
      %v906 = vpack.c.bf16 %v824, %v822
      %v907 = vpack.c.bf16 %v827, %v825
      %v908 = vpack.c.bf16 %v828, %v826
      %v909 = vpack.c.bf16 %v831, %v829
      %v910 = vpack.c.bf16 %v832, %v830
      %v911 = vpack.c.bf16 %v835, %v833
      %v912 = vpack.c.bf16 %v836, %v834
      %v913 = vpack.c.bf16 %v839, %v837
      %v914 = vpack.c.bf16 %v840, %v838
      %v915 = vpack.c.bf16 %v843, %v841
      %v916 = vpack.c.bf16 %v844, %v842
      %v917 = vpack.c.bf16 %v847, %v845
      %v918 = vpack.c.bf16 %v848, %v846
      %v919 = vpack.c.bf16 %v851, %v849
      %v920 = vpack.c.bf16 %v852, %v850
      %v921 = vpack.c.bf16 %v855, %v853
      %v922 = vpack.c.bf16 %v856, %v854
      %v923 = vpack.c.bf16 %v859, %v857
      %v924 = vpack.c.bf16 %v860, %v858
      %925 = vset.pattern.permute.xlu0 1
      %926 = vperm.xlu0 %925, %v238
      %v927 = vpop.permute.xlu0 %926
      %929 = vset.pattern.permute.xlu0 1
      %930 = vperm.xlu0 %929, %v239
      %v931 = vpop.permute.xlu0 %930
      %933 = vset.pattern.permute.xlu0 1
      %934 = vperm.xlu0 %933, %v240
      %v935 = vpop.permute.xlu0 %934
      %937 = vset.pattern.permute.xlu0 1
      %938 = vperm.xlu0 %937, %v241
      %v939 = vpop.permute.xlu0 %938
      %941 = vset.pattern.permute.xlu0 1
      %942 = vperm.xlu0 %941, %v242
      %v943 = vpop.permute.xlu0 %942
      %945 = vset.pattern.permute.xlu0 1
      %946 = vperm.xlu0 %945, %v243
      %v947 = vpop.permute.xlu0 %946
      %949 = vset.pattern.permute.xlu0 1
      %950 = vperm.xlu0 %949, %v244
      %v951 = vpop.permute.xlu0 %950
      %953 = vset.pattern.permute.xlu0 1
      %954 = vperm.xlu0 %953, %v245
      %v955 = vpop.permute.xlu0 %954
      %957 = vset.pattern.permute.xlu0 1
      %958 = vperm.xlu0 %957, %v246
      %v959 = vpop.permute.xlu0 %958
      %961 = vset.pattern.permute.xlu0 1
      %962 = vperm.xlu0 %961, %v247
      %v963 = vpop.permute.xlu0 %962
      %965 = vset.pattern.permute.xlu0 1
      %966 = vperm.xlu0 %965, %v248
      %v967 = vpop.permute.xlu0 %966
      %969 = vset.pattern.permute.xlu0 1
      %970 = vperm.xlu0 %969, %v249
      %v971 = vpop.permute.xlu0 %970
      %973 = vset.pattern.permute.xlu0 1
      %974 = vperm.xlu0 %973, %v250
      %v975 = vpop.permute.xlu0 %974
      %977 = vset.pattern.permute.xlu0 1
      %978 = vperm.xlu0 %977, %v251
      %v979 = vpop.permute.xlu0 %978
      %981 = vset.pattern.permute.xlu0 1
      %982 = vperm.xlu0 %981, %v252
      %v983 = vpop.permute.xlu0 %982
      %985 = vset.pattern.permute.xlu0 1
      %986 = vperm.xlu0 %985, %v253
      %v987 = vpop.permute.xlu0 %986
      %989 = vset.pattern.permute.xlu0 1
      %990 = vperm.xlu0 %989, %v254
      %v991 = vpop.permute.xlu0 %990
      %993 = vset.pattern.permute.xlu0 1
      %994 = vperm.xlu0 %993, %v255
      %v995 = vpop.permute.xlu0 %994
      %997 = vset.pattern.permute.xlu0 1
      %998 = vperm.xlu0 %997, %v256
      %v999 = vpop.permute.xlu0 %998
      %1001 = vset.pattern.permute.xlu0 1
      %1002 = vperm.xlu0 %1001, %v257
      %v1003 = vpop.permute.xlu0 %1002
      %1005 = vset.pattern.permute.xlu0 1
      %1006 = vperm.xlu0 %1005, %v258
      %v1007 = vpop.permute.xlu0 %1006
      %1009 = vset.pattern.permute.xlu0 1
      %1010 = vperm.xlu0 %1009, %v259
      %v1011 = vpop.permute.xlu0 %1010
      %1013 = vset.pattern.permute.xlu0 1
      %1014 = vperm.xlu0 %1013, %v260
      %v1015 = vpop.permute.xlu0 %1014
      %1017 = vset.pattern.permute.xlu0 1
      %1018 = vperm.xlu0 %1017, %v261
      %v1019 = vpop.permute.xlu0 %1018
      %1021 = vset.pattern.permute.xlu0 1
      %1022 = vperm.xlu0 %1021, %v262
      %v1023 = vpop.permute.xlu0 %1022
      %1025 = vset.pattern.permute.xlu0 1
      %1026 = vperm.xlu0 %1025, %v263
      %v1027 = vpop.permute.xlu0 %1026
      %1029 = vset.pattern.permute.xlu0 1
      %1030 = vperm.xlu0 %1029, %v264
      %v1031 = vpop.permute.xlu0 %1030
      %1033 = vset.pattern.permute.xlu0 1
      %1034 = vperm.xlu0 %1033, %v265
      %v1035 = vpop.permute.xlu0 %1034
      %1037 = vset.pattern.permute.xlu0 1
      %1038 = vperm.xlu0 %1037, %v266
      %v1039 = vpop.permute.xlu0 %1038
      %1041 = vset.pattern.permute.xlu0 1
      %1042 = vperm.xlu0 %1041, %v267
      %v1043 = vpop.permute.xlu0 %1042
      %1045 = vset.pattern.permute.xlu0 1
      %1046 = vperm.xlu0 %1045, %v268
      %v1047 = vpop.permute.xlu0 %1046
      %1049 = vset.pattern.permute.xlu0 1
      %1050 = vperm.xlu0 %1049, %v269
      %v1051 = vpop.permute.xlu0 %1050
      %v1085 = vunpack.c.l.b16 %v861
      %v1086 = vunpack.c.h.b16 %v861
      %v1087 = vunpack.c.l.b16 %v862
      %v1088 = vunpack.c.h.b16 %v862
      %v1089 = vunpack.c.l.b16 %v863
      %v1090 = vunpack.c.h.b16 %v863
      %v1091 = vunpack.c.l.b16 %v864
      %v1092 = vunpack.c.h.b16 %v864
      %v1093 = vunpack.c.l.b16 %v865
      %v1094 = vunpack.c.h.b16 %v865
      %v1095 = vunpack.c.l.b16 %v866
      %v1096 = vunpack.c.h.b16 %v866
      %v1097 = vunpack.c.l.b16 %v867
      %v1098 = vunpack.c.h.b16 %v867
      %v1099 = vunpack.c.l.b16 %v868
      %v1100 = vunpack.c.h.b16 %v868
      %v1101 = vunpack.c.l.b16 %v869
      %v1102 = vunpack.c.h.b16 %v869
      %v1103 = vunpack.c.l.b16 %v870
      %v1104 = vunpack.c.h.b16 %v870
      %v1105 = vunpack.c.l.b16 %v871
      %v1106 = vunpack.c.h.b16 %v871
      %v1107 = vunpack.c.l.b16 %v872
      %v1108 = vunpack.c.h.b16 %v872
      %v1109 = vunpack.c.l.b16 %v873
      %v1110 = vunpack.c.h.b16 %v873
      %v1111 = vunpack.c.l.b16 %v874
      %v1112 = vunpack.c.h.b16 %v874
      %v1113 = vunpack.c.l.b16 %v875
      %v1114 = vunpack.c.h.b16 %v875
      %v1115 = vunpack.c.l.b16 %v876
      %v1116 = vunpack.c.h.b16 %v876
      %v1117 = vunpack.c.l.b16 %v877
      %v1118 = vunpack.c.h.b16 %v877
      %v1119 = vunpack.c.l.b16 %v878
      %v1120 = vunpack.c.h.b16 %v878
      %v1121 = vunpack.c.l.b16 %v879
      %v1122 = vunpack.c.h.b16 %v879
      %v1123 = vunpack.c.l.b16 %v880
      %v1124 = vunpack.c.h.b16 %v880
      %v1125 = vunpack.c.l.b16 %v881
      %v1126 = vunpack.c.h.b16 %v881
      %v1127 = vunpack.c.l.b16 %v882
      %v1128 = vunpack.c.h.b16 %v882
      %v1129 = vunpack.c.l.b16 %v883
      %v1130 = vunpack.c.h.b16 %v883
      %v1131 = vunpack.c.l.b16 %v884
      %v1132 = vunpack.c.h.b16 %v884
      %v1133 = vunpack.c.l.b16 %v885
      %v1134 = vunpack.c.h.b16 %v885
      %v1135 = vunpack.c.l.b16 %v886
      %v1136 = vunpack.c.h.b16 %v886
      %v1137 = vunpack.c.l.b16 %v887
      %v1138 = vunpack.c.h.b16 %v887
      %v1139 = vunpack.c.l.b16 %v888
      %v1140 = vunpack.c.h.b16 %v888
      %v1141 = vunpack.c.l.b16 %v889
      %v1142 = vunpack.c.h.b16 %v889
      %v1143 = vunpack.c.l.b16 %v890
      %v1144 = vunpack.c.h.b16 %v890
      %v1145 = vunpack.c.l.b16 %v891
      %v1146 = vunpack.c.h.b16 %v891
      %v1147 = vunpack.c.l.b16 %v892
      %v1148 = vunpack.c.h.b16 %v892
      %v1149 = vpack.c.b16 %v1087, %v1085
      %v1150 = vpack.c.b16 %v1088, %v1086
      %v1151 = vpack.c.b16 %v1091, %v1089
      %v1152 = vpack.c.b16 %v1092, %v1090
      %v1153 = vpack.c.b16 %v1095, %v1093
      %v1154 = vpack.c.b16 %v1096, %v1094
      %v1155 = vpack.c.b16 %v1099, %v1097
      %v1156 = vpack.c.b16 %v1100, %v1098
      %v1157 = vpack.c.b16 %v1103, %v1101
      %v1158 = vpack.c.b16 %v1104, %v1102
      %v1159 = vpack.c.b16 %v1107, %v1105
      %v1160 = vpack.c.b16 %v1108, %v1106
      %v1161 = vpack.c.b16 %v1111, %v1109
      %v1162 = vpack.c.b16 %v1112, %v1110
      %v1163 = vpack.c.b16 %v1115, %v1113
      %v1164 = vpack.c.b16 %v1116, %v1114
      %v1165 = vpack.c.b16 %v1119, %v1117
      %v1166 = vpack.c.b16 %v1120, %v1118
      %v1167 = vpack.c.b16 %v1123, %v1121
      %v1168 = vpack.c.b16 %v1124, %v1122
      %v1169 = vpack.c.b16 %v1127, %v1125
      %v1170 = vpack.c.b16 %v1128, %v1126
      %v1171 = vpack.c.b16 %v1131, %v1129
      %v1172 = vpack.c.b16 %v1132, %v1130
      %v1173 = vpack.c.b16 %v1135, %v1133
      %v1174 = vpack.c.b16 %v1136, %v1134
      %v1175 = vpack.c.b16 %v1139, %v1137
      %v1176 = vpack.c.b16 %v1140, %v1138
      %v1177 = vpack.c.b16 %v1143, %v1141
      %v1178 = vpack.c.b16 %v1144, %v1142
      %v1179 = vpack.c.b16 %v1147, %v1145
      %v1180 = vpack.c.b16 %v1148, %v1146
      %1213 = vmatprep.subr.bf16.mxu0 %v894
      %1214 = vmatpush1.bf16.msra.mxu0 %v893
      %1215 = vmatprep.subr.bf16.mxu0 %v896
      %1216 = vmatpush1.bf16.msra.mxu0 %v895
      %1217 = vmatprep.subr.bf16.mxu0 %v898
      %1218 = vmatpush1.bf16.msra.mxu0 %v897
      %1219 = vmatprep.subr.bf16.mxu0 %v900
      %1220 = vmatpush1.bf16.msra.mxu0 %v899
      %1221 = vmatprep.subr.bf16.mxu0 %v902
      %1222 = vmatpush1.bf16.msra.mxu0 %v901
      %1223 = vmatprep.subr.bf16.mxu0 %v904
      %1224 = vmatpush1.bf16.msra.mxu0 %v903
      %1225 = vmatprep.subr.bf16.mxu0 %v906
      %1226 = vmatpush1.bf16.msra.mxu0 %v905
      %1227 = vmatprep.subr.bf16.mxu0 %v908
      %1228 = vmatpush1.bf16.msra.mxu0 %v907
      %1229 = vmatprep.subr.bf16.mxu0 %v910
      %1230 = vmatpush1.bf16.msra.mxu0 %v909
      %1231 = vmatprep.subr.bf16.mxu0 %v912
      %1232 = vmatpush1.bf16.msra.mxu0 %v911
      %1233 = vmatprep.subr.bf16.mxu0 %v914
      %1234 = vmatpush1.bf16.msra.mxu0 %v913
      %1235 = vmatprep.subr.bf16.mxu0 %v916
      %1236 = vmatpush1.bf16.msra.mxu0 %v915
      %1237 = vmatprep.subr.bf16.mxu0 %v918
      %1238 = vmatpush1.bf16.msra.mxu0 %v917
      %1239 = vmatprep.subr.bf16.mxu0 %v920
      %1240 = vmatpush1.bf16.msra.mxu0 %v919
      %1241 = vmatprep.subr.bf16.mxu0 %v922
      %1242 = vmatpush1.bf16.msra.mxu0 %v921
      %1243 = vmatprep.subr.bf16.mxu0 %v924
      %1244 = vmatpush1.bf16.msra.mxu0 %v923
      %1245 = vmatprep.mubr.bf16.mxu0 %v1150
      %1246 = vmatmul.mubr.bf16.gmra.mrb[0].mxu0 %v1149
      %v1247 = vpop.f32.mrb[0].mxu0
      %v1248 = vadd.f32 %v927, %v1247
      %v1249 = vpop.f32.mrb[0].mxu0
      %v1250 = vadd.f32 %v927, %v1249
      %v1251 = vpop.f32.mrb[0].mxu0
      %v1252 = vadd.f32 %v931, %v1251
      %v1253 = vpop.f32.mrb[0].mxu0
      %v1254 = vadd.f32 %v931, %v1253
      %1255 = vmatprep.mubr.bf16.mxu0 %v1152
      %1256 = vmatmul.mubr.bf16.gmra.mrb[0].mxu0 %v1151
      %v1257 = vpop.f32.mrb[0].mxu0
      %v1258 = vadd.f32 %v935, %v1257
      %v1259 = vpop.f32.mrb[0].mxu0
      %v1260 = vadd.f32 %v935, %v1259
      %v1261 = vpop.f32.mrb[0].mxu0
      %v1262 = vadd.f32 %v939, %v1261
      %v1263 = vpop.f32.mrb[0].mxu0
      %v1264 = vadd.f32 %v939, %v1263
      %1265 = vmatprep.mubr.bf16.mxu0 %v1154
      %1266 = vmatmul.mubr.bf16.gmra.mrb[0].mxu0 %v1153
      %v1267 = vpop.f32.mrb[0].mxu0
      %v1268 = vadd.f32 %v943, %v1267
      %v1269 = vpop.f32.mrb[0].mxu0
      %v1270 = vadd.f32 %v943, %v1269
      %v1271 = vpop.f32.mrb[0].mxu0
      %v1272 = vadd.f32 %v947, %v1271
      %v1273 = vpop.f32.mrb[0].mxu0
      %v1274 = vadd.f32 %v947, %v1273
      %1275 = vmatprep.mubr.bf16.mxu0 %v1156
      %1276 = vmatmul.mubr.bf16.gmra.mrb[0].mxu0 %v1155
      %v1277 = vpop.f32.mrb[0].mxu0
      %v1278 = vadd.f32 %v951, %v1277
      %v1279 = vpop.f32.mrb[0].mxu0
      %v1280 = vadd.f32 %v951, %v1279
      %v1281 = vpop.f32.mrb[0].mxu0
      %v1282 = vadd.f32 %v955, %v1281
      %v1283 = vpop.f32.mrb[0].mxu0
      %v1284 = vadd.f32 %v955, %v1283
      %1285 = vmatprep.mubr.bf16.mxu0 %v1158
      %1286 = vmatmul.mubr.bf16.gmra.mrb[0].mxu0 %v1157
      %v1287 = vpop.f32.mrb[0].mxu0
      %v1288 = vadd.f32 %v959, %v1287
      %v1289 = vpop.f32.mrb[0].mxu0
      %v1290 = vadd.f32 %v959, %v1289
      %v1291 = vpop.f32.mrb[0].mxu0
      %v1292 = vadd.f32 %v963, %v1291
      %v1293 = vpop.f32.mrb[0].mxu0
      %v1294 = vadd.f32 %v963, %v1293
      %1295 = vmatprep.mubr.bf16.mxu0 %v1160
      %1296 = vmatmul.mubr.bf16.gmra.mrb[0].mxu0 %v1159
      %v1297 = vpop.f32.mrb[0].mxu0
      %v1298 = vadd.f32 %v967, %v1297
      %v1299 = vpop.f32.mrb[0].mxu0
      %v1300 = vadd.f32 %v967, %v1299
      %v1301 = vpop.f32.mrb[0].mxu0
      %v1302 = vadd.f32 %v971, %v1301
      %v1303 = vpop.f32.mrb[0].mxu0
      %v1304 = vadd.f32 %v971, %v1303
      %1305 = vmatprep.mubr.bf16.mxu0 %v1162
      %1306 = vmatmul.mubr.bf16.gmra.mrb[0].mxu0 %v1161
      %v1307 = vpop.f32.mrb[0].mxu0
      %v1308 = vadd.f32 %v975, %v1307
      %v1309 = vpop.f32.mrb[0].mxu0
      %v1310 = vadd.f32 %v975, %v1309
      %v1311 = vpop.f32.mrb[0].mxu0
      %v1312 = vadd.f32 %v979, %v1311
      %v1313 = vpop.f32.mrb[0].mxu0
      %v1314 = vadd.f32 %v979, %v1313
      %1315 = vmatprep.mubr.bf16.mxu0 %v1164
      %1316 = vmatmul.mubr.bf16.gmra.mrb[0].mxu0 %v1163
      %v1317 = vpop.f32.mrb[0].mxu0
      %v1318 = vadd.f32 %v983, %v1317
      %v1319 = vpop.f32.mrb[0].mxu0
      %v1320 = vadd.f32 %v983, %v1319
      %v1321 = vpop.f32.mrb[0].mxu0
      %v1322 = vadd.f32 %v987, %v1321
      %v1323 = vpop.f32.mrb[0].mxu0
      %v1324 = vadd.f32 %v987, %v1323
      %1325 = vmatprep.mubr.bf16.mxu0 %v1166
      %1326 = vmatmul.mubr.bf16.gmra.mrb[0].mxu0 %v1165
      %v1327 = vpop.f32.mrb[0].mxu0
      %v1328 = vadd.f32 %v991, %v1327
      %v1329 = vpop.f32.mrb[0].mxu0
      %v1330 = vadd.f32 %v991, %v1329
      %v1331 = vpop.f32.mrb[0].mxu0
      %v1332 = vadd.f32 %v995, %v1331
      %v1333 = vpop.f32.mrb[0].mxu0
      %v1334 = vadd.f32 %v995, %v1333
      %1335 = vmatprep.mubr.bf16.mxu0 %v1168
      %1336 = vmatmul.mubr.bf16.gmra.mrb[0].mxu0 %v1167
      %v1337 = vpop.f32.mrb[0].mxu0
      %v1338 = vadd.f32 %v999, %v1337
      %v1339 = vpop.f32.mrb[0].mxu0
      %v1340 = vadd.f32 %v999, %v1339
      %v1341 = vpop.f32.mrb[0].mxu0
      %v1342 = vadd.f32 %v1003, %v1341
      %v1343 = vpop.f32.mrb[0].mxu0
      %v1344 = vadd.f32 %v1003, %v1343
      %1345 = vmatprep.mubr.bf16.mxu0 %v1170
      %1346 = vmatmul.mubr.bf16.gmra.mrb[0].mxu0 %v1169
      %v1347 = vpop.f32.mrb[0].mxu0
      %v1348 = vadd.f32 %v1007, %v1347
      %v1349 = vpop.f32.mrb[0].mxu0
      %v1350 = vadd.f32 %v1007, %v1349
      %v1351 = vpop.f32.mrb[0].mxu0
      %v1352 = vadd.f32 %v1011, %v1351
      %v1353 = vpop.f32.mrb[0].mxu0
      %v1354 = vadd.f32 %v1011, %v1353
      %1355 = vmatprep.mubr.bf16.mxu0 %v1172
      %1356 = vmatmul.mubr.bf16.gmra.mrb[0].mxu0 %v1171
      %v1357 = vpop.f32.mrb[0].mxu0
      %v1358 = vadd.f32 %v1015, %v1357
      %v1359 = vpop.f32.mrb[0].mxu0
      %v1360 = vadd.f32 %v1015, %v1359
      %v1361 = vpop.f32.mrb[0].mxu0
      %v1362 = vadd.f32 %v1019, %v1361
      %v1363 = vpop.f32.mrb[0].mxu0
      %v1364 = vadd.f32 %v1019, %v1363
      %1365 = vmatprep.mubr.bf16.mxu0 %v1174
      %1366 = vmatmul.mubr.bf16.gmra.mrb[0].mxu0 %v1173
      %v1367 = vpop.f32.mrb[0].mxu0
      %v1368 = vadd.f32 %v1023, %v1367
      %v1369 = vpop.f32.mrb[0].mxu0
      %v1370 = vadd.f32 %v1023, %v1369
      %v1371 = vpop.f32.mrb[0].mxu0
      %v1372 = vadd.f32 %v1027, %v1371
      %v1373 = vpop.f32.mrb[0].mxu0
      %v1374 = vadd.f32 %v1027, %v1373
      %1375 = vmatprep.mubr.bf16.mxu0 %v1176
      %1376 = vmatmul.mubr.bf16.gmra.mrb[0].mxu0 %v1175
      %v1377 = vpop.f32.mrb[0].mxu0
      %v1378 = vadd.f32 %v1031, %v1377
      %v1379 = vpop.f32.mrb[0].mxu0
      %v1380 = vadd.f32 %v1031, %v1379
      %v1381 = vpop.f32.mrb[0].mxu0
      %v1382 = vadd.f32 %v1035, %v1381
      %v1383 = vpop.f32.mrb[0].mxu0
      %v1384 = vadd.f32 %v1035, %v1383
      %1385 = vmatprep.mubr.bf16.mxu0 %v1178
      %1386 = vmatmul.mubr.bf16.gmra.mrb[0].mxu0 %v1177
      %v1387 = vpop.f32.mrb[0].mxu0
      %v1388 = vadd.f32 %v1039, %v1387
      %v1389 = vpop.f32.mrb[0].mxu0
      %v1390 = vadd.f32 %v1039, %v1389
      %v1391 = vpop.f32.mrb[0].mxu0
      %v1392 = vadd.f32 %v1043, %v1391
      %v1393 = vpop.f32.mrb[0].mxu0
      %v1394 = vadd.f32 %v1043, %v1393
      %1395 = vmatprep.mubr.bf16.mxu0 %v1180
      %1396 = vmatmul.mubr.bf16.gmra.mrb[0].mxu0 %v1179
      %v1397 = vpop.f32.mrb[0].mxu0
      %v1398 = vadd.f32 %v1047, %v1397
      %v1399 = vpop.f32.mrb[0].mxu0
      %v1400 = vadd.f32 %v1047, %v1399
      %v1401 = vpop.f32.mrb[0].mxu0
      %v1402 = vadd.f32 %v1051, %v1401
      %v1403 = vpop.f32.mrb[0].mxu0
      %v1404 = vadd.f32 %v1051, %v1403
      %1405 = vdwg.mxu0
      %v1406 = vmul.f32 %v1248, %v1248
      %v1407 = vmul.f32 %v1250, %v1250
      %v1408 = vmul.f32 %v1252, %v1252
      %v1409 = vmul.f32 %v1254, %v1254
      %v1410 = vmul.f32 %v1258, %v1258
      %v1411 = vmul.f32 %v1260, %v1260
      %v1412 = vmul.f32 %v1262, %v1262
      %v1413 = vmul.f32 %v1264, %v1264
      %v1414 = vmul.f32 %v1268, %v1268
      %v1415 = vmul.f32 %v1270, %v1270
      %v1416 = vmul.f32 %v1272, %v1272
      %v1417 = vmul.f32 %v1274, %v1274
      %v1418 = vmul.f32 %v1278, %v1278
      %v1419 = vmul.f32 %v1280, %v1280
      %v1420 = vmul.f32 %v1282, %v1282
      %v1421 = vmul.f32 %v1284, %v1284
      %v1422 = vmul.f32 %v1288, %v1288
      %v1423 = vmul.f32 %v1290, %v1290
      %v1424 = vmul.f32 %v1292, %v1292
      %v1425 = vmul.f32 %v1294, %v1294
      %v1426 = vmul.f32 %v1298, %v1298
      %v1427 = vmul.f32 %v1300, %v1300
      %v1428 = vmul.f32 %v1302, %v1302
      %v1429 = vmul.f32 %v1304, %v1304
      %v1430 = vmul.f32 %v1308, %v1308
      %v1431 = vmul.f32 %v1310, %v1310
      %v1432 = vmul.f32 %v1312, %v1312
      %v1433 = vmul.f32 %v1314, %v1314
      %v1434 = vmul.f32 %v1318, %v1318
      %v1435 = vmul.f32 %v1320, %v1320
      %v1436 = vmul.f32 %v1322, %v1322
      %v1437 = vmul.f32 %v1324, %v1324
      %v1438 = vmul.f32 %v1328, %v1328
      %v1439 = vmul.f32 %v1330, %v1330
      %v1440 = vmul.f32 %v1332, %v1332
      %v1441 = vmul.f32 %v1334, %v1334
      %v1442 = vmul.f32 %v1338, %v1338
      %v1443 = vmul.f32 %v1340, %v1340
      %v1444 = vmul.f32 %v1342, %v1342
      %v1445 = vmul.f32 %v1344, %v1344
      %v1446 = vmul.f32 %v1348, %v1348
      %v1447 = vmul.f32 %v1350, %v1350
      %v1448 = vmul.f32 %v1352, %v1352
      %v1449 = vmul.f32 %v1354, %v1354
      %v1450 = vmul.f32 %v1358, %v1358
      %v1451 = vmul.f32 %v1360, %v1360
      %v1452 = vmul.f32 %v1362, %v1362
      %v1453 = vmul.f32 %v1364, %v1364
      %v1454 = vmul.f32 %v1368, %v1368
      %v1455 = vmul.f32 %v1370, %v1370
      %v1456 = vmul.f32 %v1372, %v1372
      %v1457 = vmul.f32 %v1374, %v1374
      %v1458 = vmul.f32 %v1378, %v1378
      %v1459 = vmul.f32 %v1380, %v1380
      %v1460 = vmul.f32 %v1382, %v1382
      %v1461 = vmul.f32 %v1384, %v1384
      %v1462 = vmul.f32 %v1388, %v1388
      %v1463 = vmul.f32 %v1390, %v1390
      %v1464 = vmul.f32 %v1392, %v1392
      %v1465 = vmul.f32 %v1394, %v1394
      %v1466 = vmul.f32 %v1398, %v1398
      %v1467 = vmul.f32 %v1400, %v1400
      %v1468 = vmul.f32 %v1402, %v1402
      %v1469 = vmul.f32 %v1404, %v1404
      %v1470 = vadd.f32 %v1406, %v1408
      %v1471 = vadd.f32 %v1470, %v1410
      %v1472 = vadd.f32 %v1471, %v1412
      %v1473 = vadd.f32 %v1472, %v1414
      %v1474 = vadd.f32 %v1473, %v1416
      %v1475 = vadd.f32 %v1474, %v1418
      %v1476 = vadd.f32 %v1475, %v1420
      %v1477 = vadd.f32 %v1476, %v1422
      %v1478 = vadd.f32 %v1477, %v1424
      %v1479 = vadd.f32 %v1478, %v1426
      %v1480 = vadd.f32 %v1479, %v1428
      %v1481 = vadd.f32 %v1480, %v1430
      %v1482 = vadd.f32 %v1481, %v1432
      %v1483 = vadd.f32 %v1482, %v1434
      %v1484 = vadd.f32 %v1483, %v1436
      %v1485 = vadd.f32 %v1484, %v1438
      %v1486 = vadd.f32 %v1485, %v1440
      %v1487 = vadd.f32 %v1486, %v1442
      %v1488 = vadd.f32 %v1487, %v1444
      %v1489 = vadd.f32 %v1488, %v1446
      %v1490 = vadd.f32 %v1489, %v1448
      %v1491 = vadd.f32 %v1490, %v1450
      %v1492 = vadd.f32 %v1491, %v1452
      %v1493 = vadd.f32 %v1492, %v1454
      %v1494 = vadd.f32 %v1493, %v1456
      %v1495 = vadd.f32 %v1494, %v1458
      %v1496 = vadd.f32 %v1495, %v1460
      %v1497 = vadd.f32 %v1496, %v1462
      %v1498 = vadd.f32 %v1497, %v1464
      %v1499 = vadd.f32 %v1498, %v1466
      %v1500 = vadd.f32 %v1499, %v1468
      %v1501 = vrot.slane %v1500, 4
      %v1502 = vadd.f32 %v1500, %v1501
      %v1503 = vrot.slane %v1502, 2
      %v1504 = vadd.f32 %v1502, %v1503
      %v1505 = vrot.slane %v1504, 1
      %v1506 = vadd.f32 %v1504, %v1505
      %v1507 = vadd.f32 %v1407, %v1409
      %v1508 = vadd.f32 %v1507, %v1411
      %v1509 = vadd.f32 %v1508, %v1413
      %v1510 = vadd.f32 %v1509, %v1415
      %v1511 = vadd.f32 %v1510, %v1417
      %v1512 = vadd.f32 %v1511, %v1419
      %v1513 = vadd.f32 %v1512, %v1421
      %v1514 = vadd.f32 %v1513, %v1423
      %v1515 = vadd.f32 %v1514, %v1425
      %v1516 = vadd.f32 %v1515, %v1427
      %v1517 = vadd.f32 %v1516, %v1429
      %v1518 = vadd.f32 %v1517, %v1431
      %v1519 = vadd.f32 %v1518, %v1433
      %v1520 = vadd.f32 %v1519, %v1435
      %v1521 = vadd.f32 %v1520, %v1437
      %v1522 = vadd.f32 %v1521, %v1439
      %v1523 = vadd.f32 %v1522, %v1441
      %v1524 = vadd.f32 %v1523, %v1443
      %v1525 = vadd.f32 %v1524, %v1445
      %v1526 = vadd.f32 %v1525, %v1447
      %v1527 = vadd.f32 %v1526, %v1449
      %v1528 = vadd.f32 %v1527, %v1451
      %v1529 = vadd.f32 %v1528, %v1453
      %v1530 = vadd.f32 %v1529, %v1455
      %v1531 = vadd.f32 %v1530, %v1457
      %v1532 = vadd.f32 %v1531, %v1459
      %v1533 = vadd.f32 %v1532, %v1461
      %v1534 = vadd.f32 %v1533, %v1463
      %v1535 = vadd.f32 %v1534, %v1465
      %v1536 = vadd.f32 %v1535, %v1467
      %v1537 = vadd.f32 %v1536, %v1469
      %v1538 = vrot.slane %v1537, 4
      %v1539 = vadd.f32 %v1537, %v1538
      %v1540 = vrot.slane %v1539, 2
      %v1541 = vadd.f32 %v1539, %v1540
      %v1542 = vrot.slane %v1541, 1
      %v1543 = vadd.f32 %v1541, %v1542
      %v1544 = vmax.f32 %v1506, 1e-24
      %v1545 = vmax.f32 %v1543, 1e-24
      %v1546 = vrsqrt.pop %v1544
      %v1547 = vrsqrt.pop %v1545
      %v1548 = vmul.f32 %v1248, %v1546
      %v1549 = vmul.f32 %v1250, %v1547
      %v1550 = vmul.f32 %v1252, %v1546
      %v1551 = vmul.f32 %v1254, %v1547
      %v1552 = vmul.f32 %v1258, %v1546
      %v1553 = vmul.f32 %v1260, %v1547
      %v1554 = vmul.f32 %v1262, %v1546
      %v1555 = vmul.f32 %v1264, %v1547
      %v1556 = vmul.f32 %v1268, %v1546
      %v1557 = vmul.f32 %v1270, %v1547
      %v1558 = vmul.f32 %v1272, %v1546
      %v1559 = vmul.f32 %v1274, %v1547
      %v1560 = vmul.f32 %v1278, %v1546
      %v1561 = vmul.f32 %v1280, %v1547
      %v1562 = vmul.f32 %v1282, %v1546
      %v1563 = vmul.f32 %v1284, %v1547
      %v1564 = vmul.f32 %v1288, %v1546
      %v1565 = vmul.f32 %v1290, %v1547
      %v1566 = vmul.f32 %v1292, %v1546
      %v1567 = vmul.f32 %v1294, %v1547
      %v1568 = vmul.f32 %v1298, %v1546
      %v1569 = vmul.f32 %v1300, %v1547
      %v1570 = vmul.f32 %v1302, %v1546
      %v1571 = vmul.f32 %v1304, %v1547
      %v1572 = vmul.f32 %v1308, %v1546
      %v1573 = vmul.f32 %v1310, %v1547
      %v1574 = vmul.f32 %v1312, %v1546
      %v1575 = vmul.f32 %v1314, %v1547
      %v1576 = vmul.f32 %v1318, %v1546
      %v1577 = vmul.f32 %v1320, %v1547
      %v1578 = vmul.f32 %v1322, %v1546
      %v1579 = vmul.f32 %v1324, %v1547
      %v1580 = vmul.f32 %v1328, %v1546
      %v1581 = vmul.f32 %v1330, %v1547
      %v1582 = vmul.f32 %v1332, %v1546
      %v1583 = vmul.f32 %v1334, %v1547
      %v1584 = vmul.f32 %v1338, %v1546
      %v1585 = vmul.f32 %v1340, %v1547
      %v1586 = vmul.f32 %v1342, %v1546
      %v1587 = vmul.f32 %v1344, %v1547
      %v1588 = vmul.f32 %v1348, %v1546
      %v1589 = vmul.f32 %v1350, %v1547
      %v1590 = vmul.f32 %v1352, %v1546
      %v1591 = vmul.f32 %v1354, %v1547
      %v1592 = vmul.f32 %v1358, %v1546
      %v1593 = vmul.f32 %v1360, %v1547
      %v1594 = vmul.f32 %v1362, %v1546
      %v1595 = vmul.f32 %v1364, %v1547
      %v1596 = vmul.f32 %v1368, %v1546
      %v1597 = vmul.f32 %v1370, %v1547
      %v1598 = vmul.f32 %v1372, %v1546
      %v1599 = vmul.f32 %v1374, %v1547
      %v1600 = vmul.f32 %v1378, %v1546
      %v1601 = vmul.f32 %v1380, %v1547
      %v1602 = vmul.f32 %v1382, %v1546
      %v1603 = vmul.f32 %v1384, %v1547
      %v1604 = vmul.f32 %v1388, %v1546
      %v1605 = vmul.f32 %v1390, %v1547
      %v1606 = vmul.f32 %v1392, %v1546
      %v1607 = vmul.f32 %v1394, %v1547
      %v1608 = vmul.f32 %v1398, %v1546
      %v1609 = vmul.f32 %v1400, %v1547
      %v1610 = vmul.f32 %v1402, %v1546
      %v1611 = vmul.f32 %v1404, %v1547
      %1612 = vst [vmem:[%s235] sm:$0xff] %v1548
      %1613 = vst [vmem:[%s235 + $0x8] sm:$0xff] %v1549
      %1614 = vst [vmem:[%s235 + $0x10] sm:$0xff] %v1550
      %1615 = vst [vmem:[%s235 + $0x18] sm:$0xff] %v1551
      %1616 = vst [vmem:[%s235 + $0x20] sm:$0xff] %v1552
      %1617 = vst [vmem:[%s235 + $0x28] sm:$0xff] %v1553
      %1618 = vst [vmem:[%s235 + $0x30] sm:$0xff] %v1554
      %1619 = vst [vmem:[%s235 + $0x38] sm:$0xff] %v1555
      %1620 = vst [vmem:[%s235 + $0x40] sm:$0xff] %v1556
      %1621 = vst [vmem:[%s235 + $0x48] sm:$0xff] %v1557
      %1622 = vst [vmem:[%s235 + $0x50] sm:$0xff] %v1558
      %1623 = vst [vmem:[%s235 + $0x58] sm:$0xff] %v1559
      %1624 = vst [vmem:[%s235 + $0x60] sm:$0xff] %v1560
      %1625 = vst [vmem:[%s235 + $0x68] sm:$0xff] %v1561
      %1626 = vst [vmem:[%s235 + $0x70] sm:$0xff] %v1562
      %1627 = vst [vmem:[%s235 + $0x78] sm:$0xff] %v1563
      %1628 = vst [vmem:[%s235 + $0x80] sm:$0xff] %v1564
      %1629 = vst [vmem:[%s235 + $0x88] sm:$0xff] %v1565
      %1630 = vst [vmem:[%s235 + $0x90] sm:$0xff] %v1566
      %1631 = vst [vmem:[%s235 + $0x98] sm:$0xff] %v1567
      %1632 = vst [vmem:[%s235 + $0xa0] sm:$0xff] %v1568
      %1633 = vst [vmem:[%s235 + $0xa8] sm:$0xff] %v1569
      %1634 = vst [vmem:[%s235 + $0xb0] sm:$0xff] %v1570
      %1635 = vst [vmem:[%s235 + $0xb8] sm:$0xff] %v1571
      %1636 = vst [vmem:[%s235 + $0xc0] sm:$0xff] %v1572
      %1637 = vst [vmem:[%s235 + $0xc8] sm:$0xff] %v1573
      %1638 = vst [vmem:[%s235 + $0xd0] sm:$0xff] %v1574
      %1639 = vst [vmem:[%s235 + $0xd8] sm:$0xff] %v1575
      %1640 = vst [vmem:[%s235 + $0xe0] sm:$0xff] %v1576
      %1641 = vst [vmem:[%s235 + $0xe8] sm:$0xff] %v1577
      %1642 = vst [vmem:[%s235 + $0xf0] sm:$0xff] %v1578
      %1643 = vst [vmem:[%s235 + $0xf8] sm:$0xff] %v1579
      %1644 = vst [vmem:[%s235 + $0x100] sm:$0xff] %v1580
      %1645 = vst [vmem:[%s235 + $0x108] sm:$0xff] %v1581
      %1646 = vst [vmem:[%s235 + $0x110] sm:$0xff] %v1582
      %1647 = vst [vmem:[%s235 + $0x118] sm:$0xff] %v1583
      %1648 = vst [vmem:[%s235 + $0x120] sm:$0xff] %v1584
      %1649 = vst [vmem:[%s235 + $0x128] sm:$0xff] %v1585
      %1650 = vst [vmem:[%s235 + $0x130] sm:$0xff] %v1586
      %1651 = vst [vmem:[%s235 + $0x138] sm:$0xff] %v1587
      %1652 = vst [vmem:[%s235 + $0x140] sm:$0xff] %v1588
      %1653 = vst [vmem:[%s235 + $0x148] sm:$0xff] %v1589
      %1654 = vst [vmem:[%s235 + $0x150] sm:$0xff] %v1590
      %1655 = vst [vmem:[%s235 + $0x158] sm:$0xff] %v1591
      %1656 = vst [vmem:[%s235 + $0x160] sm:$0xff] %v1592
      %1657 = vst [vmem:[%s235 + $0x168] sm:$0xff] %v1593
      %1658 = vst [vmem:[%s235 + $0x170] sm:$0xff] %v1594
      %1659 = vst [vmem:[%s235 + $0x178] sm:$0xff] %v1595
      %1660 = vst [vmem:[%s235 + $0x180] sm:$0xff] %v1596
      %1661 = vst [vmem:[%s235 + $0x188] sm:$0xff] %v1597
      %1662 = vst [vmem:[%s235 + $0x190] sm:$0xff] %v1598
      %1663 = vst [vmem:[%s235 + $0x198] sm:$0xff] %v1599
      %1664 = vst [vmem:[%s235 + $0x1a0] sm:$0xff] %v1600
      %1665 = vst [vmem:[%s235 + $0x1a8] sm:$0xff] %v1601
      %1666 = vst [vmem:[%s235 + $0x1b0] sm:$0xff] %v1602
      %1667 = vst [vmem:[%s235 + $0x1b8] sm:$0xff] %v1603
      %1668 = vst [vmem:[%s235 + $0x1c0] sm:$0xff] %v1604
      %1669 = vst [vmem:[%s235 + $0x1c8] sm:$0xff] %v1605
      %1670 = vst [vmem:[%s235 + $0x1d0] sm:$0xff] %v1606
      %1671 = vst [vmem:[%s235 + $0x1d8] sm:$0xff] %v1607
      %1672 = vst [vmem:[%s235 + $0x1e0] sm:$0xff] %v1608
      %1673 = vst [vmem:[%s235 + $0x1e8] sm:$0xff] %v1609
      %1674 = vst [vmem:[%s235 + $0x1f0] sm:$0xff] %v1610
      %1675 = vst [vmem:[%s235 + $0x1f8] sm:$0xff] %v1611
      %s1676 = smul.u32 2, %s20
      %p1677 = scmp.lt.s32.totalorder %s19, 1
      %s1678 = scalar_select %p1677, %s19, 1
      %p1679 = scmp.lt.s32.totalorder %s1676, 1
      %s1680 = scalar_select %p1679, %s1676, 1
      %s1681 = smul.addr %s1678, 64
      %s1682 = sadd.s32 %s1680, %s1681
      %s1683 = smul.addr %s1682, 8
      %s1684 = scalar_lea.vmem %s4, %s1683
      // Predicated region
      $region37: #{projection_head_pallas.1} parent=35 // pred_check
        %p1685 = pneg %p138
      $region38: #{projection_head_pallas.1} parent=35 // pred_check_branch
        %1687 = sbr.rel (%p1685) target = $region40
      $region39: #{projection_head_pallas.1} parent=35 // pred_region
        %s1688 = smul.u32 2, %s20
      $region40: #{projection_head_pallas.1} parent=35 // pred_fallthru
        _
    $region36: #{projection_head_pallas.1} parent=5 // pred_fallthru
      _
    %p1689 = scmp.le.s32.totalorder 2, %s10
    // Predicated region
    $region41: #{projection_head_pallas.1} parent=5 // pred_check
      %p1690 = pneg %p1689
    $region42: #{projection_head_pallas.1} parent=5 // pred_check_branch
      %1692 = sbr.rel (%p1690) target = $region44
    $region43: #{projection_head_pallas.1} parent=5 // pred_region
      %s1693 = ssub.s32 %s10, 2
      // Predicated region
      $region45: #{projection_head_pallas.1} parent=43 // pred_check
        %p1694 = pneg %p144
      $region46: #{projection_head_pallas.1} parent=43 // pred_check_branch
        %1696 = sbr.rel (%p1694) target = $region48
      $region47: #{projection_head_pallas.1} parent=43 // pred_region
        %s1697 = smul.u32 2, %s22
        %p1698 = scmp.lt.s32.totalorder %s21, 1
        %s1699 = scalar_select %p1698, %s21, 1
        %p1700 = scmp.lt.s32.totalorder %s1697, 1
        %s1701 = scalar_select %p1700, %s1697, 1
        %s1702 = smul.addr %s1699, 64
        %s1703 = sadd.s32 %s1701, %s1702
        %s1704 = smul.addr %s1703, 8
        %s1705 = scalar_lea.vmem %s4, %s1704
      $region48: #{projection_head_pallas.1} parent=43 // pred_fallthru
        _
    $region44: #{projection_head_pallas.1} parent=5 // pred_fallthru
      _
  $region6: #{projection_head_pallas.1} parent=0 // loop_footer
    %s14 = sadd.s32 1, %s10
  $region7: #{projection_head_pallas.1} parent=0 // loop_footer_branch
    %9 = sbr.rel target = $region3
  $region8: #{projection_head_pallas.1} parent=0 // loop_exit
    _

</llo_original>
